<compile_context>
chip_gen: v7x
topology: tpu7x:2x2x1
jax: 0.10.0
libtpu: 0.0.40
codegen_flags: <defaults>
</compile_context>

<pallas_src>
import jax
import jax.numpy as jnp
from jax.experimental import pallas as pl
from jax.experimental.pallas import tpu as pltpu


def mlp_softmax_kernel(x_ref, w1_ref, b1_ref, w2_ref, b2_ref, w3_ref, b3_ref,
                       o_ref):
    # (TB, 3072) @ (3072, 200) + (1, 200) -> ReLU      (bf16 in, f32 acc)
    h1 = jnp.dot(x_ref[...], w1_ref[...], preferred_element_type=jnp.float32)
    h1 = jnp.maximum(h1 + b1_ref[...], 0.0)
    # (TB, 200) @ (200, 150) + (1, 150) -> ReLU
    h2 = jnp.dot(h1.astype(w2_ref.dtype), w2_ref[...],
                 preferred_element_type=jnp.float32)
    h2 = jnp.maximum(h2 + b2_ref[...], 0.0)
    # (TB, 150) @ (150, 10) + (1, 10)
    logits = jnp.dot(h2.astype(w3_ref.dtype), w3_ref[...],
                     preferred_element_type=jnp.float32)
    logits = logits + b3_ref[...]
    # Softmax over the class axis (PyTorch dim=1 == last axis here).
    m = jnp.max(logits, axis=-1, keepdims=True)
    e = jnp.exp(logits - m)
    inv = pl.reciprocal(jnp.sum(e, axis=-1, keepdims=True), approx=True)
    o_ref[...] = (e * inv).astype(o_ref.dtype)


def mlp_forward(x_nchw, params):
    w1, b1, w2, b2, w3, b3 = params
    B = x_nchw.shape[0]

    # nn.Flatten(): row-major flatten of (C, H, W) -> 3072 (plain-JAX glue).
    x2d = x_nchw.reshape(B, -1)
    D_in = x2d.shape[1]

    # Batch tile: multiple of 8 (sublane), capped at 256 to bound VMEM and
    # keep x-tile double-buffering effective at large batch sizes.
    TB = min(256, ((B + 7) // 8) * 8)
    Bp = ((B + TB - 1) // TB) * TB
    if Bp != B:
        x2d = jnp.pad(x2d, ((0, Bp - B), (0, 0)))

    # Cast MXU inputs to bf16 once, outside the kernel (halves weight DMA).
    x_bf = x2d.astype(jnp.bfloat16)
    w1b = w1.astype(jnp.bfloat16)
    w2b = w2.astype(jnp.bfloat16)
    w3b = w3.astype(jnp.bfloat16)

    # Weights/biases: full blocks, constant index_map -> loaded once, resident.
    resident = lambda shape: pl.BlockSpec(shape, lambda i: (0, 0))

    out = pl.pallas_call(
        mlp_softmax_kernel,
        out_shape=jax.ShapeDtypeStruct((Bp, 10), jnp.float32),
        grid=(Bp // TB,),
        in_specs=[
            pl.BlockSpec((TB, D_in), lambda i: (i, 0)),      # x tile
            resident(w1b.shape), resident(b1.shape),
            resident(w2b.shape), resident(b2.shape),
            resident(w3b.shape), resident(b3.shape),
        ],
        out_specs=pl.BlockSpec((TB, 10), lambda i: (i, 0)),
        compiler_params=pltpu.CompilerParams(
            dimension_semantics=("parallel",)),
    )(x_bf, w1b, b1, w2b, b2, w3b, b3)

    return out[:B]


def mlp_reference(x_nchw, params):
    """Pure-JAX f32 reference for correctness checking."""
    w1, b1, w2, b2, w3, b3 = params
    x = x_nchw.reshape(x_nchw.shape[0], -1)
    h1 = jnp.maximum(x @ w1 + b1, 0.0)
    h2 = jnp.maximum(h1 @ w2 + b2, 0.0)
    logits = h2 @ w3 + b3
    return jax.nn.softmax(logits, axis=-1)


def init_params(key):
    """Deterministic init mimicking nn.Linear defaults (U[-1/sqrt(fan_in), +])."""
    def linear(k, fan_in, fan_out):
        kw, kb = jax.random.split(k)
        bound = 1.0 / jnp.sqrt(float(fan_in))
        w = jax.random.uniform(kw, (fan_in, fan_out), jnp.float32, -bound, bound)
        b = jax.random.uniform(kb, (1, fan_out), jnp.float32, -bound, bound)
        return w, b

    k1, k2, k3 = jax.random.split(key, 3)
    w1, b1 = linear(k1, 3072, 200)
    w2, b2 = linear(k2, 200, 150)
    w3, b3 = linear(k3, 150, 10)
    return (w1, b1, w2, b2, w3, b3)


if __name__ == "__main__":
    key = jax.random.PRNGKey(0)
    k_params, k_x = jax.random.split(key)

    params = init_params(k_params)
    # Input consistent with Linear(3072, ...): (B, 3, 32, 32) NCHW
    x = jax.random.normal(k_x, (2, 3, 32, 32), jnp.float32)

    out = mlp_forward(x, params)
    out = jax.block_until_ready(out)

    assert out.shape == (2, 10)
    # softmax rows sum to ~1 (bf16 matmuls + approx reciprocal)
    assert jnp.allclose(jnp.sum(out, axis=1), 1.0, atol=1e-2)
    # match the f32 reference within bf16/approx-reciprocal tolerance
    ref = mlp_reference(x, params)
    assert jnp.allclose(out, ref, atol=2e-2), float(jnp.max(jnp.abs(out - ref)))

    print("KERNEL_OK")
</pallas_src>

<mosaic_0001>
module attributes {stable_mosaic.version = 11 : i64} {
  func.func @mlp_softmax_kernel(%arg0: i32, %arg1: memref<8x3072xbf16, #tpu.memory_space<vmem>>, %arg2: memref<3072x200xbf16, #tpu.memory_space<vmem>>, %arg3: memref<1x200xf32, #tpu.memory_space<vmem>>, %arg4: memref<200x150xbf16, #tpu.memory_space<vmem>>, %arg5: memref<1x150xf32, #tpu.memory_space<vmem>>, %arg6: memref<150x10xbf16, #tpu.memory_space<vmem>>, %arg7: memref<1x10xf32, #tpu.memory_space<vmem>>, %arg8: memref<8x10xf32, #tpu.memory_space<vmem>>) attributes {dimension_semantics = [#tpu.dimension_semantics<parallel>], iteration_bounds = array<i64: 1>, scalar_prefetch = 0 : i64, scratch_operands = 0 : i64, tpu.core_type = #tpu.core_type<tc>, window_params = [{transform_indices = @transform_0, window_bounds = array<i64: 8, 3072>}, {pipeline_mode = #tpu.pipeline_mode<synchronous>, transform_indices = @transform_1, window_bounds = array<i64: 3072, 200>}, {pipeline_mode = #tpu.pipeline_mode<synchronous>, transform_indices = @transform_2, window_bounds = array<i64: 1, 200>}, {pipeline_mode = #tpu.pipeline_mode<synchronous>, transform_indices = @transform_3, window_bounds = array<i64: 200, 150>}, {pipeline_mode = #tpu.pipeline_mode<synchronous>, transform_indices = @transform_4, window_bounds = array<i64: 1, 150>}, {pipeline_mode = #tpu.pipeline_mode<synchronous>, transform_indices = @transform_5, window_bounds = array<i64: 150, 10>}, {pipeline_mode = #tpu.pipeline_mode<synchronous>, transform_indices = @transform_6, window_bounds = array<i64: 1, 10>}, {transform_indices = @transform_7, window_bounds = array<i64: 8, 10>}]} {
    %c0 = arith.constant 0 : index
    %c0_0 = arith.constant 0 : index
    %0 = vector.load %arg1[%c0, %c0_0] : memref<8x3072xbf16, #tpu.memory_space<vmem>>, vector<8x3072xbf16>
    %c0_1 = arith.constant 0 : index
    %c0_2 = arith.constant 0 : index
    %1 = vector.load %arg2[%c0_1, %c0_2] : memref<3072x200xbf16, #tpu.memory_space<vmem>>, vector<3072x200xbf16>
    %cst = arith.constant dense<0.000000e+00> : vector<8x200xf32>
    %2 = tpu.matmul %0, %1, %cst {dimension_numbers = #tpu.dot_dimension_numbers<[1], [0], [0], [1], [0, 0, 1, 1], [], []>} : vector<8x3072xbf16>, vector<3072x200xbf16>, vector<8x200xf32> -> vector<8x200xf32>
    %c0_3 = arith.constant 0 : index
    %c0_4 = arith.constant 0 : index
    %3 = vector.load %arg3[%c0_3, %c0_4] : memref<1x200xf32, #tpu.memory_space<vmem>>, vector<1x200xf32>
    %4 = vector.broadcast %3 : vector<1x200xf32> to vector<8x200xf32>
    %5 = arith.addf %2, %4 : vector<8x200xf32>
    %cst_5 = arith.constant 0.000000e+00 : f32
    %6 = vector.broadcast %cst_5 : f32 to vector<8x200xf32>
    %7 = arith.maximumf %5, %6 : vector<8x200xf32>
    %8 = arith.truncf %7 : vector<8x200xf32> to vector<8x200xbf16>
    %c0_6 = arith.constant 0 : index
    %c0_7 = arith.constant 0 : index
    %9 = vector.load %arg4[%c0_6, %c0_7] : memref<200x150xbf16, #tpu.memory_space<vmem>>, vector<200x150xbf16>
    %cst_8 = arith.constant dense<0.000000e+00> : vector<8x150xf32>
    %10 = tpu.matmul %8, %9, %cst_8 {dimension_numbers = #tpu.dot_dimension_numbers<[1], [0], [0], [1], [0, 0, 1, 1], [], []>} : vector<8x200xbf16>, vector<200x150xbf16>, vector<8x150xf32> -> vector<8x150xf32>
    %c0_9 = arith.constant 0 : index
    %c0_10 = arith.constant 0 : index
    %11 = vector.load %arg5[%c0_9, %c0_10] : memref<1x150xf32, #tpu.memory_space<vmem>>, vector<1x150xf32>
    %12 = vector.broadcast %11 : vector<1x150xf32> to vector<8x150xf32>
    %13 = arith.addf %10, %12 : vector<8x150xf32>
    %cst_11 = arith.constant 0.000000e+00 : f32
    %14 = vector.broadcast %cst_11 : f32 to vector<8x150xf32>
    %15 = arith.maximumf %13, %14 : vector<8x150xf32>
    %16 = arith.truncf %15 : vector<8x150xf32> to vector<8x150xbf16>
    %c0_12 = arith.constant 0 : index
    %c0_13 = arith.constant 0 : index
    %17 = vector.load %arg6[%c0_12, %c0_13] : memref<150x10xbf16, #tpu.memory_space<vmem>>, vector<150x10xbf16>
    %cst_14 = arith.constant dense<0.000000e+00> : vector<8x10xf32>
    %18 = tpu.matmul %16, %17, %cst_14 {dimension_numbers = #tpu.dot_dimension_numbers<[1], [0], [0], [1], [0, 0, 1, 1], [], []>} : vector<8x150xbf16>, vector<150x10xbf16>, vector<8x10xf32> -> vector<8x10xf32>
    %c0_15 = arith.constant 0 : index
    %c0_16 = arith.constant 0 : index
    %19 = vector.load %arg7[%c0_15, %c0_16] : memref<1x10xf32, #tpu.memory_space<vmem>>, vector<1x10xf32>
    %20 = vector.broadcast %19 : vector<1x10xf32> to vector<8x10xf32>
    %21 = arith.addf %18, %20 : vector<8x10xf32>
    %cst_17 = arith.constant dense<0xFF800000> : vector<8xf32>
    %22 = vector.multi_reduction <maximumf>, %21, %cst_17 [1] : vector<8x10xf32> to vector<8xf32>
    %23 = vector.shape_cast %22 : vector<8xf32> to vector<8x1xf32>
    %24 = vector.broadcast %23 : vector<8x1xf32> to vector<8x10xf32>
    %25 = arith.subf %21, %24 : vector<8x10xf32>
    %26 = math.exp %25 : vector<8x10xf32>
    %cst_18 = arith.constant dense<0.000000e+00> : vector<8xf32>
    %27 = vector.multi_reduction <add>, %26, %cst_18 [1] : vector<8x10xf32> to vector<8xf32>
    %28 = vector.shape_cast %27 : vector<8xf32> to vector<8x1xf32>
    %29 = tpu.reciprocal %28 {approx = true} : vector<8x1xf32> -> vector<8x1xf32>
    %30 = vector.broadcast %29 : vector<8x1xf32> to vector<8x10xf32>
    %31 = arith.mulf %26, %30 : vector<8x10xf32>
    %c0_19 = arith.constant 0 : index
    %c0_20 = arith.constant 0 : index
    %32 = vector.load %arg8[%c0_19, %c0_20] : memref<8x10xf32, #tpu.memory_space<vmem>>, vector<8x10xf32>
    tpu.vector_store %arg8[%c0_19, %c0_20], %31 {strides = array<i32>} : memref<8x10xf32, #tpu.memory_space<vmem>>, vector<8x10xf32>,
    return
  }
  func.func @transform_0(%arg0: i32) -> (i32, i32) {
    %c0_i32 = arith.constant 0 : i32
    %c0_i32_0 = arith.constant 0 : i32
    return %arg0, %c0_i32 : i32, i32
  }
  func.func @transform_1(%arg0: i32) -> (i32, i32) {
    %c0_i32 = arith.constant 0 : i32
    %c0_i32_0 = arith.constant 0 : i32
    %c0_i32_1 = arith.constant 0 : i32
    return %c0_i32, %c0_i32_0 : i32, i32
  }
  func.func @transform_2(%arg0: i32) -> (i32, i32) {
    %c0_i32 = arith.constant 0 : i32
    %c0_i32_0 = arith.constant 0 : i32
    %c0_i32_1 = arith.constant 0 : i32
    return %c0_i32, %c0_i32_0 : i32, i32
  }
  func.func @transform_3(%arg0: i32) -> (i32, i32) {
    %c0_i32 = arith.constant 0 : i32
    %c0_i32_0 = arith.constant 0 : i32
    %c0_i32_1 = arith.constant 0 : i32
    return %c0_i32, %c0_i32_0 : i32, i32
  }
  func.func @transform_4(%arg0: i32) -> (i32, i32) {
    %c0_i32 = arith.constant 0 : i32
    %c0_i32_0 = arith.constant 0 : i32
    %c0_i32_1 = arith.constant 0 : i32
    return %c0_i32, %c0_i32_0 : i32, i32
  }
  func.func @transform_5(%arg0: i32) -> (i32, i32) {
    %c0_i32 = arith.constant 0 : i32
    %c0_i32_0 = arith.constant 0 : i32
    %c0_i32_1 = arith.constant 0 : i32
    return %c0_i32, %c0_i32_0 : i32, i32
  }
  func.func @transform_6(%arg0: i32) -> (i32, i32) {
    %c0_i32 = arith.constant 0 : i32
    %c0_i32_0 = arith.constant 0 : i32
    %c0_i32_1 = arith.constant 0 : i32
    return %c0_i32, %c0_i32_0 : i32, i32
  }
  func.func @transform_7(%arg0: i32) -> (i32, i32) {
    %c0_i32 = arith.constant 0 : i32
    %c0_i32_0 = arith.constant 0 : i32
    return %arg0, %c0_i32 : i32, i32
  }
}

</mosaic_0001>

<llo_original>
// kernel: tpu_custom_call.1
$region0: #{tpu_custom_call.1}
  #allocation0 [shape = 'u32[]', space=smem, size = 0x4, offset = 0x4, fixed_abs, tag = 'smem constant byte address 0x4 - core index']
  #allocation1 [shape = 'u32[144,128]{1,0:T(1,128)}', space=vmem, size = 0x12000, scoped, tag = 'internal scratch']
  %s0 = inlined_call_operand.vmem [shape: bf16[8,3072], index: 0, kind: input, shape index: {}]
  %s1 = inlined_call_operand.vmem [shape: bf16[3072,200], index: 1, kind: input, shape index: {}]
  %s2 = inlined_call_operand.vmem [shape: f32[1,200], index: 2, kind: input, shape index: {}]
  %s3 = inlined_call_operand.vmem [shape: bf16[200,150], index: 3, kind: input, shape index: {}]
  %s4 = inlined_call_operand.vmem [shape: f32[1,150], index: 4, kind: input, shape index: {}]
  %s5 = inlined_call_operand.vmem [shape: bf16[150,10], index: 5, kind: input, shape index: {}]
  %s6 = inlined_call_operand.vmem [shape: f32[1,10], index: 6, kind: input, shape index: {}]
  %s7 = inlined_call_operand.hbm [shape: f32[8,10], index: 7, kind: output, shape index: {}]
  %s8 = sld [smem:[#allocation0]]
  $region38: #{tpu_custom_call.1} parent=0
    _
  %s10 = ssub.s32 1, %s8
  %s11 = scalar_select 0, %s10, %s8
  $region1: #{tpu_custom_call.1} parent=0
    #allocation2 [shape = 'u8[4096]{0}', space=vmem, size = 0x1000, scoped, tag = 'output window, operand 0, single buffered']
    #allocation3 [shape = 's32[1]{0}', space=sflag, size = 0x4, scoped, tag = 'scoped memory for tpu_custom_call.1']
    %12 = vsyncpa [#allocation3], 0
    // Predicated region
    $region2: #{tpu_custom_call.1} parent=1 // pred_check
      _
    $region3: #{tpu_custom_call.1} parent=1 // pred_check_branch
      %14 = sbr.rel (0) target = $region5
    $region4: #{tpu_custom_call.1} parent=1 // pred_region
      _
    $region5: #{tpu_custom_call.1} parent=1 // pred_fallthru
      _
    // Predicated region
    $region6: #{tpu_custom_call.1} parent=1 // pred_check
      _
    $region7: #{tpu_custom_call.1} parent=1 // pred_check_branch
      %16 = sbr.rel (0) target = $region9
    $region8: #{tpu_custom_call.1} parent=1 // pred_region
      _
    $region9: #{tpu_custom_call.1} parent=1 // pred_fallthru
      _
    // Predicated region
    $region10: #{tpu_custom_call.1} parent=1 // pred_check
      _
    $region11: #{tpu_custom_call.1} parent=1 // pred_check_branch
      %18 = sbr.rel (0) target = $region13
    $region12: #{tpu_custom_call.1} parent=1 // pred_region
      _
    $region13: #{tpu_custom_call.1} parent=1 // pred_fallthru
      _
    // Predicated region
    $region14: #{tpu_custom_call.1} parent=1 // pred_check
      _
    $region15: #{tpu_custom_call.1} parent=1 // pred_check_branch
      %20 = sbr.rel (0) target = $region17
    $region16: #{tpu_custom_call.1} parent=1 // pred_region
      _
    $region17: #{tpu_custom_call.1} parent=1 // pred_fallthru
      _
    // Predicated region
    $region18: #{tpu_custom_call.1} parent=1 // pred_check
      _
    $region19: #{tpu_custom_call.1} parent=1 // pred_check_branch
      %22 = sbr.rel (0) target = $region21
    $region20: #{tpu_custom_call.1} parent=1 // pred_region
      _
    $region21: #{tpu_custom_call.1} parent=1 // pred_fallthru
      _
    // Predicated region
    $region22: #{tpu_custom_call.1} parent=1 // pred_check
      _
    $region23: #{tpu_custom_call.1} parent=1 // pred_check_branch
      %24 = sbr.rel (0) target = $region25
    $region24: #{tpu_custom_call.1} parent=1 // pred_region
      _
    $region25: #{tpu_custom_call.1} parent=1 // pred_fallthru
      _
    // Predicated region
    $region26: #{tpu_custom_call.1} parent=1 // pred_check
      _
    $region27: #{tpu_custom_call.1} parent=1 // pred_check_branch
      %26 = sbr.rel (0) target = $region29
    $region28: #{tpu_custom_call.1} parent=1 // pred_region
      _
    $region29: #{tpu_custom_call.1} parent=1 // pred_fallthru
      _
    %v28 = vld [vmem:[%s0] sm:$0xff]
    %v29 = vld [vmem:[%s0 + $0x8] sm:$0xff]
    %v30 = vld [vmem:[%s0 + $0x10] sm:$0xff]
    %v31 = vld [vmem:[%s0 + $0x18] sm:$0xff]
    %v32 = vld [vmem:[%s0 + $0x20] sm:$0xff]
    %v33 = vld [vmem:[%s0 + $0x28] sm:$0xff]
    %v34 = vld [vmem:[%s0 + $0x30] sm:$0xff]
    %v35 = vld [vmem:[%s0 + $0x38] sm:$0xff]
    %v36 = vld [vmem:[%s0 + $0x40] sm:$0xff]
    %v37 = vld [vmem:[%s0 + $0x48] sm:$0xff]
    %v38 = vld [vmem:[%s0 + $0x50] sm:$0xff]
    %v39 = vld [vmem:[%s0 + $0x58] sm:$0xff]
    %v40 = vld [vmem:[%s1] sm:$0xff]
    %v41 = vld [vmem:[%s1 + $0x8] sm:$0xff]
    %v42 = vld [vmem:[%s1 + $0x10] sm:$0xff]
    %v43 = vld [vmem:[%s1 + $0x18] sm:$0xff]
    %v44 = vld [vmem:[%s1 + $0x20] sm:$0xff]
    %v45 = vld [vmem:[%s1 + $0x28] sm:$0xff]
    %v46 = vld [vmem:[%s1 + $0x30] sm:$0xff]
    %v47 = vld [vmem:[%s1 + $0x38] sm:$0xff]
    %v48 = vld [vmem:[%s1 + $0x40] sm:$0xff]
    %v49 = vld [vmem:[%s1 + $0x48] sm:$0xff]
    %v50 = vld [vmem:[%s1 + $0x50] sm:$0xff]
    %v51 = vld [vmem:[%s1 + $0x58] sm:$0xff]
    %v52 = vld [vmem:[%s1 + $0x60] sm:$0xff]
    %v53 = vld [vmem:[%s1 + $0x68] sm:$0xff]
    %v54 = vld [vmem:[%s1 + $0x70] sm:$0xff]
    %v55 = vld [vmem:[%s1 + $0x78] sm:$0xff]
    %v56 = vld [vmem:[%s1 + $0x80] sm:$0xff]
    %v57 = vld [vmem:[%s1 + $0x88] sm:$0xff]
    %v58 = vld [vmem:[%s1 + $0x90] sm:$0xff]
    %v59 = vld [vmem:[%s1 + $0x98] sm:$0xff]
    %v60 = vld [vmem:[%s1 + $0xa0] sm:$0xff]
    %v61 = vld [vmem:[%s1 + $0xa8] sm:$0xff]
    %v62 = vld [vmem:[%s1 + $0xb0] sm:$0xff]
    %v63 = vld [vmem:[%s1 + $0xb8] sm:$0xff]
    %v64 = vld [vmem:[%s1 + $0xc0] sm:$0xff]
    %v65 = vld [vmem:[%s1 + $0xc8] sm:$0xff]
    %v66 = vld [vmem:[%s1 + $0xd0] sm:$0xff]
    %v67 = vld [vmem:[%s1 + $0xd8] sm:$0xff]
    %v68 = vld [vmem:[%s1 + $0xe0] sm:$0xff]
    %v69 = vld [vmem:[%s1 + $0xe8] sm:$0xff]
    %v70 = vld [vmem:[%s1 + $0xf0] sm:$0xff]
    %v71 = vld [vmem:[%s1 + $0xf8] sm:$0xff]
    %v72 = vld [vmem:[%s1 + $0x100] sm:$0xff]
    %v73 = vld [vmem:[%s1 + $0x108] sm:$0xff]
    %v74 = vld [vmem:[%s1 + $0x110] sm:$0xff]
    %v75 = vld [vmem:[%s1 + $0x118] sm:$0xff]
    %v76 = vld [vmem:[%s1 + $0x120] sm:$0xff]
    %v77 = vld [vmem:[%s1 + $0x128] sm:$0xff]
    %v78 = vld [vmem:[%s1 + $0x130] sm:$0xff]
    %v79 = vld [vmem:[%s1 + $0x138] sm:$0xff]
    %v80 = vld [vmem:[%s1 + $0x140] sm:$0xff]
    %v81 = vld [vmem:[%s1 + $0x148] sm:$0xff]
    %v82 = vld [vmem:[%s1 + $0x150] sm:$0xff]
    %v83 = vld [vmem:[%s1 + $0x158] sm:$0xff]
    %v84 = vld [vmem:[%s1 + $0x160] sm:$0xff]
    %v85 = vld [vmem:[%s1 + $0x168] sm:$0xff]
    %v86 = vld [vmem:[%s1 + $0x170] sm:$0xff]
    %v87 = vld [vmem:[%s1 + $0x178] sm:$0xff]
    %v88 = vld [vmem:[%s1 + $0x180] sm:$0xff]
    %v89 = vld [vmem:[%s1 + $0x188] sm:$0xff]
    %v90 = vld [vmem:[%s1 + $0x190] sm:$0xff]
    %v91 = vld [vmem:[%s1 + $0x198] sm:$0xff]
    %v92 = vld [vmem:[%s1 + $0x1a0] sm:$0xff]
    %v93 = vld [vmem:[%s1 + $0x1a8] sm:$0xff]
    %v94 = vld [vmem:[%s1 + $0x1b0] sm:$0xff]
    %v95 = vld [vmem:[%s1 + $0x1b8] sm:$0xff]
    %v96 = vld [vmem:[%s1 + $0x1c0] sm:$0xff]
    %v97 = vld [vmem:[%s1 + $0x1c8] sm:$0xff]
    %v98 = vld [vmem:[%s1 + $0x1d0] sm:$0xff]
    %v99 = vld [vmem:[%s1 + $0x1d8] sm:$0xff]
    %v100 = vld [vmem:[%s1 + $0x1e0] sm:$0xff]
    %v101 = vld [vmem:[%s1 + $0x1e8] sm:$0xff]
    %v102 = vld [vmem:[%s1 + $0x1f0] sm:$0xff]
    %v103 = vld [vmem:[%s1 + $0x1f8] sm:$0xff]
    %v104 = vld [vmem:[%s1 + $0x200] sm:$0xff]
    %v105 = vld [vmem:[%s1 + $0x208] sm:$0xff]
    %v106 = vld [vmem:[%s1 + $0x210] sm:$0xff]
    %v107 = vld [vmem:[%s1 + $0x218] sm:$0xff]
    %v108 = vld [vmem:[%s1 + $0x220] sm:$0xff]
    %v109 = vld [vmem:[%s1 + $0x228] sm:$0xff]
    %v110 = vld [vmem:[%s1 + $0x230] sm:$0xff]
    %v111 = vld [vmem:[%s1 + $0x238] sm:$0xff]
    %v112 = vld [vmem:[%s1 + $0x240] sm:$0xff]
    %v113 = vld [vmem:[%s1 + $0x248] sm:$0xff]
    %v114 = vld [vmem:[%s1 + $0x250] sm:$0xff]
    %v115 = vld [vmem:[%s1 + $0x258] sm:$0xff]
    %v116 = vld [vmem:[%s1 + $0x260] sm:$0xff]
    %v117 = vld [vmem:[%s1 + $0x268] sm:$0xff]
    %v118 = vld [vmem:[%s1 + $0x270] sm:$0xff]
    %v119 = vld [vmem:[%s1 + $0x278] sm:$0xff]
    %v120 = vld [vmem:[%s1 + $0x280] sm:$0xff]
    %v121 = vld [vmem:[%s1 + $0x288] sm:$0xff]
    %v122 = vld [vmem:[%s1 + $0x290] sm:$0xff]
    %v123 = vld [vmem:[%s1 + $0x298] sm:$0xff]
    %v124 = vld [vmem:[%s1 + $0x2a0] sm:$0xff]
    %v125 = vld [vmem:[%s1 + $0x2a8] sm:$0xff]
    %v126 = vld [vmem:[%s1 + $0x2b0] sm:$0xff]
    %v127 = vld [vmem:[%s1 + $0x2b8] sm:$0xff]
    %v128 = vld [vmem:[%s1 + $0x2c0] sm:$0xff]
    %v129 = vld [vmem:[%s1 + $0x2c8] sm:$0xff]
    %v130 = vld [vmem:[%s1 + $0x2d0] sm:$0xff]
    %v131 = vld [vmem:[%s1 + $0x2d8] sm:$0xff]
    %v132 = vld [vmem:[%s1 + $0x2e0] sm:$0xff]
    %v133 = vld [vmem:[%s1 + $0x2e8] sm:$0xff]
    %v134 = vld [vmem:[%s1 + $0x2f0] sm:$0xff]
    %v135 = vld [vmem:[%s1 + $0x2f8] sm:$0xff]
    %v136 = vld [vmem:[%s1 + $0x300] sm:$0xff]
    %v137 = vld [vmem:[%s1 + $0x308] sm:$0xff]
    %v138 = vld [vmem:[%s1 + $0x310] sm:$0xff]
    %v139 = vld [vmem:[%s1 + $0x318] sm:$0xff]
    %v140 = vld [vmem:[%s1 + $0x320] sm:$0xff]
    %v141 = vld [vmem:[%s1 + $0x328] sm:$0xff]
    %v142 = vld [vmem:[%s1 + $0x330] sm:$0xff]
    %v143 = vld [vmem:[%s1 + $0x338] sm:$0xff]
    %v144 = vld [vmem:[%s1 + $0x340] sm:$0xff]
    %v145 = vld [vmem:[%s1 + $0x348] sm:$0xff]
    %v146 = vld [vmem:[%s1 + $0x350] sm:$0xff]
    %v147 = vld [vmem:[%s1 + $0x358] sm:$0xff]
    %v148 = vld [vmem:[%s1 + $0x360] sm:$0xff]
    %v149 = vld [vmem:[%s1 + $0x368] sm:$0xff]
    %v150 = vld [vmem:[%s1 + $0x370] sm:$0xff]
    %v151 = vld [vmem:[%s1 + $0x378] sm:$0xff]
    %v152 = vld [vmem:[%s1 + $0x380] sm:$0xff]
    %v153 = vld [vmem:[%s1 + $0x388] sm:$0xff]
    %v154 = vld [vmem:[%s1 + $0x390] sm:$0xff]
    %v155 = vld [vmem:[%s1 + $0x398] sm:$0xff]
    %v156 = vld [vmem:[%s1 + $0x3a0] sm:$0xff]
    %v157 = vld [vmem:[%s1 + $0x3a8] sm:$0xff]
    %v158 = vld [vmem:[%s1 + $0x3b0] sm:$0xff]
    %v159 = vld [vmem:[%s1 + $0x3b8] sm:$0xff]
    %v160 = vld [vmem:[%s1 + $0x3c0] sm:$0xff]
    %v161 = vld [vmem:[%s1 + $0x3c8] sm:$0xff]
    %v162 = vld [vmem:[%s1 + $0x3d0] sm:$0xff]
    %v163 = vld [vmem:[%s1 + $0x3d8] sm:$0xff]
    %v164 = vld [vmem:[%s1 + $0x3e0] sm:$0xff]
    %v165 = vld [vmem:[%s1 + $0x3e8] sm:$0xff]
    %v166 = vld [vmem:[%s1 + $0x3f0] sm:$0xff]
    %v167 = vld [vmem:[%s1 + $0x3f8] sm:$0xff]
    %v168 = vld [vmem:[%s1 + $0x400] sm:$0xff]
    %v169 = vld [vmem:[%s1 + $0x408] sm:$0xff]
    %v170 = vld [vmem:[%s1 + $0x410] sm:$0xff]
    %v171 = vld [vmem:[%s1 + $0x418] sm:$0xff]
    %v172 = vld [vmem:[%s1 + $0x420] sm:$0xff]
    %v173 = vld [vmem:[%s1 + $0x428] sm:$0xff]
    %v174 = vld [vmem:[%s1 + $0x430] sm:$0xff]
    %v175 = vld [vmem:[%s1 + $0x438] sm:$0xff]
    %v176 = vld [vmem:[%s1 + $0x440] sm:$0xff]
    %v177 = vld [vmem:[%s1 + $0x448] sm:$0xff]
    %v178 = vld [vmem:[%s1 + $0x450] sm:$0xff]
    %v179 = vld [vmem:[%s1 + $0x458] sm:$0xff]
    %v180 = vld [vmem:[%s1 + $0x460] sm:$0xff]
    %v181 = vld [vmem:[%s1 + $0x468] sm:$0xff]
    %v182 = vld [vmem:[%s1 + $0x470] sm:$0xff]
    %v183 = vld [vmem:[%s1 + $0x478] sm:$0xff]
    %v184 = vld [vmem:[%s1 + $0x480] sm:$0xff]
    %v185 = vld [vmem:[%s1 + $0x488] sm:$0xff]
    %v186 = vld [vmem:[%s1 + $0x490] sm:$0xff]
    %v187 = vld [vmem:[%s1 + $0x498] sm:$0xff]
    %v188 = vld [vmem:[%s1 + $0x4a0] sm:$0xff]
    %v189 = vld [vmem:[%s1 + $0x4a8] sm:$0xff]
    %v190 = vld [vmem:[%s1 + $0x4b0] sm:$0xff]
    %v191 = vld [vmem:[%s1 + $0x4b8] sm:$0xff]
    %v192 = vld [vmem:[%s1 + $0x4c0] sm:$0xff]
    %v193 = vld [vmem:[%s1 + $0x4c8] sm:$0xff]
    %v194 = vld [vmem:[%s1 + $0x4d0] sm:$0xff]
    %v195 = vld [vmem:[%s1 + $0x4d8] sm:$0xff]
    %v196 = vld [vmem:[%s1 + $0x4e0] sm:$0xff]
    %v197 = vld [vmem:[%s1 + $0x4e8] sm:$0xff]
    %v198 = vld [vmem:[%s1 + $0x4f0] sm:$0xff]
    %v199 = vld [vmem:[%s1 + $0x4f8] sm:$0xff]
    %v200 = vld [vmem:[%s1 + $0x500] sm:$0xff]
    %v201 = vld [vmem:[%s1 + $0x508] sm:$0xff]
    %v202 = vld [vmem:[%s1 + $0x510] sm:$0xff]
    %v203 = vld [vmem:[%s1 + $0x518] sm:$0xff]
    %v204 = vld [vmem:[%s1 + $0x520] sm:$0xff]
    %v205 = vld [vmem:[%s1 + $0x528] sm:$0xff]
    %v206 = vld [vmem:[%s1 + $0x530] sm:$0xff]
    %v207 = vld [vmem:[%s1 + $0x538] sm:$0xff]
    %v208 = vld [vmem:[%s1 + $0x540] sm:$0xff]
    %v209 = vld [vmem:[%s1 + $0x548] sm:$0xff]
    %v210 = vld [vmem:[%s1 + $0x550] sm:$0xff]
    %v211 = vld [vmem:[%s1 + $0x558] sm:$0xff]
    %v212 = vld [vmem:[%s1 + $0x560] sm:$0xff]
    %v213 = vld [vmem:[%s1 + $0x568] sm:$0xff]
    %v214 = vld [vmem:[%s1 + $0x570] sm:$0xff]
    %v215 = vld [vmem:[%s1 + $0x578] sm:$0xff]
    %v216 = vld [vmem:[%s1 + $0x580] sm:$0xff]
    %v217 = vld [vmem:[%s1 + $0x588] sm:$0xff]
    %v218 = vld [vmem:[%s1 + $0x590] sm:$0xff]
    %v219 = vld [vmem:[%s1 + $0x598] sm:$0xff]
    %v220 = vld [vmem:[%s1 + $0x5a0] sm:$0xff]
    %v221 = vld [vmem:[%s1 + $0x5a8] sm:$0xff]
    %v222 = vld [vmem:[%s1 + $0x5b0] sm:$0xff]
    %v223 = vld [vmem:[%s1 + $0x5b8] sm:$0xff]
    %v224 = vld [vmem:[%s1 + $0x5c0] sm:$0xff]
    %v225 = vld [vmem:[%s1 + $0x5c8] sm:$0xff]
    %v226 = vld [vmem:[%s1 + $0x5d0] sm:$0xff]
    %v227 = vld [vmem:[%s1 + $0x5d8] sm:$0xff]
    %v228 = vld [vmem:[%s1 + $0x5e0] sm:$0xff]
    %v229 = vld [vmem:[%s1 + $0x5e8] sm:$0xff]
    %v230 = vld [vmem:[%s1 + $0x5f0] sm:$0xff]
    %v231 = vld [vmem:[%s1 + $0x5f8] sm:$0xff]
    %v232 = vld [vmem:[%s1 + $0x600] sm:$0xff]
    %v233 = vld [vmem:[%s1 + $0x608] sm:$0xff]
    %v234 = vld [vmem:[%s1 + $0x610] sm:$0xff]
    %v235 = vld [vmem:[%s1 + $0x618] sm:$0xff]
    %v236 = vld [vmem:[%s1 + $0x620] sm:$0xff]
    %v237 = vld [vmem:[%s1 + $0x628] sm:$0xff]
    %v238 = vld [vmem:[%s1 + $0x630] sm:$0xff]
    %v239 = vld [vmem:[%s1 + $0x638] sm:$0xff]
    %v240 = vld [vmem:[%s1 + $0x640] sm:$0xff]
    %v241 = vld [vmem:[%s1 + $0x648] sm:$0xff]
    %v242 = vld [vmem:[%s1 + $0x650] sm:$0xff]
    %v243 = vld [vmem:[%s1 + $0x658] sm:$0xff]
    %v244 = vld [vmem:[%s1 + $0x660] sm:$0xff]
    %v245 = vld [vmem:[%s1 + $0x668] sm:$0xff]
    %v246 = vld [vmem:[%s1 + $0x670] sm:$0xff]
    %v247 = vld [vmem:[%s1 + $0x678] sm:$0xff]
    %v248 = vld [vmem:[%s1 + $0x680] sm:$0xff]
    %v249 = vld [vmem:[%s1 + $0x688] sm:$0xff]
    %v250 = vld [vmem:[%s1 + $0x690] sm:$0xff]
    %v251 = vld [vmem:[%s1 + $0x698] sm:$0xff]
    %v252 = vld [vmem:[%s1 + $0x6a0] sm:$0xff]
    %v253 = vld [vmem:[%s1 + $0x6a8] sm:$0xff]
    %v254 = vld [vmem:[%s1 + $0x6b0] sm:$0xff]
    %v255 = vld [vmem:[%s1 + $0x6b8] sm:$0xff]
    %v256 = vld [vmem:[%s1 + $0x6c0] sm:$0xff]
    %v257 = vld [vmem:[%s1 + $0x6c8] sm:$0xff]
    %v258 = vld [vmem:[%s1 + $0x6d0] sm:$0xff]
    %v259 = vld [vmem:[%s1 + $0x6d8] sm:$0xff]
    %v260 = vld [vmem:[%s1 + $0x6e0] sm:$0xff]
    %v261 = vld [vmem:[%s1 + $0x6e8] sm:$0xff]
    %v262 = vld [vmem:[%s1 + $0x6f0] sm:$0xff]
    %v263 = vld [vmem:[%s1 + $0x6f8] sm:$0xff]
    %v264 = vld [vmem:[%s1 + $0x700] sm:$0xff]
    %v265 = vld [vmem:[%s1 + $0x708] sm:$0xff]
    %v266 = vld [vmem:[%s1 + $0x710] sm:$0xff]
    %v267 = vld [vmem:[%s1 + $0x718] sm:$0xff]
    %v268 = vld [vmem:[%s1 + $0x720] sm:$0xff]
    %v269 = vld [vmem:[%s1 + $0x728] sm:$0xff]
    %v270 = vld [vmem:[%s1 + $0x730] sm:$0xff]
    %v271 = vld [vmem:[%s1 + $0x738] sm:$0xff]
    %v272 = vld [vmem:[%s1 + $0x740] sm:$0xff]
    %v273 = vld [vmem:[%s1 + $0x748] sm:$0xff]
    %v274 = vld [vmem:[%s1 + $0x750] sm:$0xff]
    %v275 = vld [vmem:[%s1 + $0x758] sm:$0xff]
    %v276 = vld [vmem:[%s1 + $0x760] sm:$0xff]
    %v277 = vld [vmem:[%s1 + $0x768] sm:$0xff]
    %v278 = vld [vmem:[%s1 + $0x770] sm:$0xff]
    %v279 = vld [vmem:[%s1 + $0x778] sm:$0xff]
    %v280 = vld [vmem:[%s1 + $0x780] sm:$0xff]
    %v281 = vld [vmem:[%s1 + $0x788] sm:$0xff]
    %v282 = vld [vmem:[%s1 + $0x790] sm:$0xff]
    %v283 = vld [vmem:[%s1 + $0x798] sm:$0xff]
    %v284 = vld [vmem:[%s1 + $0x7a0] sm:$0xff]
    %v285 = vld [vmem:[%s1 + $0x7a8] sm:$0xff]
    %v286 = vld [vmem:[%s1 + $0x7b0] sm:$0xff]
    %v287 = vld [vmem:[%s1 + $0x7b8] sm:$0xff]
    %v288 = vld [vmem:[%s1 + $0x7c0] sm:$0xff]
    %v289 = vld [vmem:[%s1 + $0x7c8] sm:$0xff]
    %v290 = vld [vmem:[%s1 + $0x7d0] sm:$0xff]
    %v291 = vld [vmem:[%s1 + $0x7d8] sm:$0xff]
    %v292 = vld [vmem:[%s1 + $0x7e0] sm:$0xff]
    %v293 = vld [vmem:[%s1 + $0x7e8] sm:$0xff]
    %v294 = vld [vmem:[%s1 + $0x7f0] sm:$0xff]
    %v295 = vld [vmem:[%s1 + $0x7f8] sm:$0xff]
    %v296 = vld [vmem:[%s1 + $0x800] sm:$0xff]
    %v297 = vld [vmem:[%s1 + $0x808] sm:$0xff]
    %v298 = vld [vmem:[%s1 + $0x810] sm:$0xff]
    %v299 = vld [vmem:[%s1 + $0x818] sm:$0xff]
    %v300 = vld [vmem:[%s1 + $0x820] sm:$0xff]
    %v301 = vld [vmem:[%s1 + $0x828] sm:$0xff]
    %v302 = vld [vmem:[%s1 + $0x830] sm:$0xff]
    %v303 = vld [vmem:[%s1 + $0x838] sm:$0xff]
    %v304 = vld [vmem:[%s1 + $0x840] sm:$0xff]
    %v305 = vld [vmem:[%s1 + $0x848] sm:$0xff]
    %v306 = vld [vmem:[%s1 + $0x850] sm:$0xff]
    %v307 = vld [vmem:[%s1 + $0x858] sm:$0xff]
    %v308 = vld [vmem:[%s1 + $0x860] sm:$0xff]
    %v309 = vld [vmem:[%s1 + $0x868] sm:$0xff]
    %v310 = vld [vmem:[%s1 + $0x870] sm:$0xff]
    %v311 = vld [vmem:[%s1 + $0x878] sm:$0xff]
    %v312 = vld [vmem:[%s1 + $0x880] sm:$0xff]
    %v313 = vld [vmem:[%s1 + $0x888] sm:$0xff]
    %v314 = vld [vmem:[%s1 + $0x890] sm:$0xff]
    %v315 = vld [vmem:[%s1 + $0x898] sm:$0xff]
    %v316 = vld [vmem:[%s1 + $0x8a0] sm:$0xff]
    %v317 = vld [vmem:[%s1 + $0x8a8] sm:$0xff]
    %v318 = vld [vmem:[%s1 + $0x8b0] sm:$0xff]
    %v319 = vld [vmem:[%s1 + $0x8b8] sm:$0xff]
    %v320 = vld [vmem:[%s1 + $0x8c0] sm:$0xff]
    %v321 = vld [vmem:[%s1 + $0x8c8] sm:$0xff]
    %v322 = vld [vmem:[%s1 + $0x8d0] sm:$0xff]
    %v323 = vld [vmem:[%s1 + $0x8d8] sm:$0xff]
    %v324 = vld [vmem:[%s1 + $0x8e0] sm:$0xff]
    %v325 = vld [vmem:[%s1 + $0x8e8] sm:$0xff]
    %v326 = vld [vmem:[%s1 + $0x8f0] sm:$0xff]
    %v327 = vld [vmem:[%s1 + $0x8f8] sm:$0xff]
    %v328 = vld [vmem:[%s1 + $0x900] sm:$0xff]
    %v329 = vld [vmem:[%s1 + $0x908] sm:$0xff]
    %v330 = vld [vmem:[%s1 + $0x910] sm:$0xff]
    %v331 = vld [vmem:[%s1 + $0x918] sm:$0xff]
    %v332 = vld [vmem:[%s1 + $0x920] sm:$0xff]
    %v333 = vld [vmem:[%s1 + $0x928] sm:$0xff]
    %v334 = vld [vmem:[%s1 + $0x930] sm:$0xff]
    %v335 = vld [vmem:[%s1 + $0x938] sm:$0xff]
    %v336 = vld [vmem:[%s1 + $0x940] sm:$0xff]
    %v337 = vld [vmem:[%s1 + $0x948] sm:$0xff]
    %v338 = vld [vmem:[%s1 + $0x950] sm:$0xff]
    %v339 = vld [vmem:[%s1 + $0x958] sm:$0xff]
    %v340 = vld [vmem:[%s1 + $0x960] sm:$0xff]
    %v341 = vld [vmem:[%s1 + $0x968] sm:$0xff]
    %v342 = vld [vmem:[%s1 + $0x970] sm:$0xff]
    %v343 = vld [vmem:[%s1 + $0x978] sm:$0xff]
    %v344 = vld [vmem:[%s1 + $0x980] sm:$0xff]
    %v345 = vld [vmem:[%s1 + $0x988] sm:$0xff]
    %v346 = vld [vmem:[%s1 + $0x990] sm:$0xff]
    %v347 = vld [vmem:[%s1 + $0x998] sm:$0xff]
    %v348 = vld [vmem:[%s1 + $0x9a0] sm:$0xff]
    %v349 = vld [vmem:[%s1 + $0x9a8] sm:$0xff]
    %v350 = vld [vmem:[%s1 + $0x9b0] sm:$0xff]
    %v351 = vld [vmem:[%s1 + $0x9b8] sm:$0xff]
    %v352 = vld [vmem:[%s1 + $0x9c0] sm:$0xff]
    %v353 = vld [vmem:[%s1 + $0x9c8] sm:$0xff]
    %v354 = vld [vmem:[%s1 + $0x9d0] sm:$0xff]
    %v355 = vld [vmem:[%s1 + $0x9d8] sm:$0xff]
    %v356 = vld [vmem:[%s1 + $0x9e0] sm:$0xff]
    %v357 = vld [vmem:[%s1 + $0x9e8] sm:$0xff]
    %v358 = vld [vmem:[%s1 + $0x9f0] sm:$0xff]
    %v359 = vld [vmem:[%s1 + $0x9f8] sm:$0xff]
    %v360 = vld [vmem:[%s1 + $0xa00] sm:$0xff]
    %v361 = vld [vmem:[%s1 + $0xa08] sm:$0xff]
    %v362 = vld [vmem:[%s1 + $0xa10] sm:$0xff]
    %v363 = vld [vmem:[%s1 + $0xa18] sm:$0xff]
    %v364 = vld [vmem:[%s1 + $0xa20] sm:$0xff]
    %v365 = vld [vmem:[%s1 + $0xa28] sm:$0xff]
    %v366 = vld [vmem:[%s1 + $0xa30] sm:$0xff]
    %v367 = vld [vmem:[%s1 + $0xa38] sm:$0xff]
    %v368 = vld [vmem:[%s1 + $0xa40] sm:$0xff]
    %v369 = vld [vmem:[%s1 + $0xa48] sm:$0xff]
    %v370 = vld [vmem:[%s1 + $0xa50] sm:$0xff]
    %v371 = vld [vmem:[%s1 + $0xa58] sm:$0xff]
    %v372 = vld [vmem:[%s1 + $0xa60] sm:$0xff]
    %v373 = vld [vmem:[%s1 + $0xa68] sm:$0xff]
    %v374 = vld [vmem:[%s1 + $0xa70] sm:$0xff]
    %v375 = vld [vmem:[%s1 + $0xa78] sm:$0xff]
    %v376 = vld [vmem:[%s1 + $0xa80] sm:$0xff]
    %v377 = vld [vmem:[%s1 + $0xa88] sm:$0xff]
    %v378 = vld [vmem:[%s1 + $0xa90] sm:$0xff]
    %v379 = vld [vmem:[%s1 + $0xa98] sm:$0xff]
    %v380 = vld [vmem:[%s1 + $0xaa0] sm:$0xff]
    %v381 = vld [vmem:[%s1 + $0xaa8] sm:$0xff]
    %v382 = vld [vmem:[%s1 + $0xab0] sm:$0xff]
    %v383 = vld [vmem:[%s1 + $0xab8] sm:$0xff]
    %v384 = vld [vmem:[%s1 + $0xac0] sm:$0xff]
    %v385 = vld [vmem:[%s1 + $0xac8] sm:$0xff]
    %v386 = vld [vmem:[%s1 + $0xad0] sm:$0xff]
    %v387 = vld [vmem:[%s1 + $0xad8] sm:$0xff]
    %v388 = vld [vmem:[%s1 + $0xae0] sm:$0xff]
    %v389 = vld [vmem:[%s1 + $0xae8] sm:$0xff]
    %v390 = vld [vmem:[%s1 + $0xaf0] sm:$0xff]
    %v391 = vld [vmem:[%s1 + $0xaf8] sm:$0xff]
    %v392 = vld [vmem:[%s1 + $0xb00] sm:$0xff]
    %v393 = vld [vmem:[%s1 + $0xb08] sm:$0xff]
    %v394 = vld [vmem:[%s1 + $0xb10] sm:$0xff]
    %v395 = vld [vmem:[%s1 + $0xb18] sm:$0xff]
    %v396 = vld [vmem:[%s1 + $0xb20] sm:$0xff]
    %v397 = vld [vmem:[%s1 + $0xb28] sm:$0xff]
    %v398 = vld [vmem:[%s1 + $0xb30] sm:$0xff]
    %v399 = vld [vmem:[%s1 + $0xb38] sm:$0xff]
    %v400 = vld [vmem:[%s1 + $0xb40] sm:$0xff]
    %v401 = vld [vmem:[%s1 + $0xb48] sm:$0xff]
    %v402 = vld [vmem:[%s1 + $0xb50] sm:$0xff]
    %v403 = vld [vmem:[%s1 + $0xb58] sm:$0xff]
    %v404 = vld [vmem:[%s1 + $0xb60] sm:$0xff]
    %v405 = vld [vmem:[%s1 + $0xb68] sm:$0xff]
    %v406 = vld [vmem:[%s1 + $0xb70] sm:$0xff]
    %v407 = vld [vmem:[%s1 + $0xb78] sm:$0xff]
    %v408 = vld [vmem:[%s1 + $0xb80] sm:$0xff]
    %v409 = vld [vmem:[%s1 + $0xb88] sm:$0xff]
    %v410 = vld [vmem:[%s1 + $0xb90] sm:$0xff]
    %v411 = vld [vmem:[%s1 + $0xb98] sm:$0xff]
    %v412 = vld [vmem:[%s1 + $0xba0] sm:$0xff]
    %v413 = vld [vmem:[%s1 + $0xba8] sm:$0xff]
    %v414 = vld [vmem:[%s1 + $0xbb0] sm:$0xff]
    %v415 = vld [vmem:[%s1 + $0xbb8] sm:$0xff]
    %v416 = vld [vmem:[%s1 + $0xbc0] sm:$0xff]
    %v417 = vld [vmem:[%s1 + $0xbc8] sm:$0xff]
    %v418 = vld [vmem:[%s1 + $0xbd0] sm:$0xff]
    %v419 = vld [vmem:[%s1 + $0xbd8] sm:$0xff]
    %v420 = vld [vmem:[%s1 + $0xbe0] sm:$0xff]
    %v421 = vld [vmem:[%s1 + $0xbe8] sm:$0xff]
    %v422 = vld [vmem:[%s1 + $0xbf0] sm:$0xff]
    %v423 = vld [vmem:[%s1 + $0xbf8] sm:$0xff]
    %v424 = vld [vmem:[%s2] sm:$0x3]
    %v426 = vlaneseq
    %v427 = vshrl.u32 %v426, 7
    %v428 = vsub.s32 0, %v427
    %v429 = vrot.slane %v424, %v428
    %v430 = vlaneseq
    %v431 = vshrl.u32 %v430, 7
    %v432 = vsub.s32 1, %v431
    %v433 = vrot.slane %v424, %v432
    %v448 = vunpack.c.l.b16 %v28
    %v449 = vunpack.c.h.b16 %v28
    %v450 = vunpack.c.l.b16 %v29
    %v451 = vunpack.c.h.b16 %v29
    %v452 = vunpack.c.l.b16 %v30
    %v453 = vunpack.c.h.b16 %v30
    %v454 = vunpack.c.l.b16 %v31
    %v455 = vunpack.c.h.b16 %v31
    %v456 = vunpack.c.l.b16 %v32
    %v457 = vunpack.c.h.b16 %v32
    %v458 = vunpack.c.l.b16 %v33
    %v459 = vunpack.c.h.b16 %v33
    %v460 = vunpack.c.l.b16 %v34
    %v461 = vunpack.c.h.b16 %v34
    %v462 = vunpack.c.l.b16 %v35
    %v463 = vunpack.c.h.b16 %v35
    %v464 = vunpack.c.l.b16 %v36
    %v465 = vunpack.c.h.b16 %v36
    %v466 = vunpack.c.l.b16 %v37
    %v467 = vunpack.c.h.b16 %v37
    %v468 = vunpack.c.l.b16 %v38
    %v469 = vunpack.c.h.b16 %v38
    %v470 = vunpack.c.l.b16 %v39
    %v471 = vunpack.c.h.b16 %v39
    %v472 = vpack.c.b16 %v448, %v448
    %v473 = vpack.c.b16 %v449, %v449
    %v474 = vpack.c.b16 %v450, %v450
    %v475 = vpack.c.b16 %v451, %v451
    %v476 = vpack.c.b16 %v452, %v452
    %v477 = vpack.c.b16 %v453, %v453
    %v478 = vpack.c.b16 %v454, %v454
    %v479 = vpack.c.b16 %v455, %v455
    %v480 = vpack.c.b16 %v456, %v456
    %v481 = vpack.c.b16 %v457, %v457
    %v482 = vpack.c.b16 %v458, %v458
    %v483 = vpack.c.b16 %v459, %v459
    %v484 = vpack.c.b16 %v460, %v460
    %v485 = vpack.c.b16 %v461, %v461
    %v486 = vpack.c.b16 %v462, %v462
    %v487 = vpack.c.b16 %v463, %v463
    %v488 = vpack.c.b16 %v464, %v464
    %v489 = vpack.c.b16 %v465, %v465
    %v490 = vpack.c.b16 %v466, %v466
    %v491 = vpack.c.b16 %v467, %v467
    %v492 = vpack.c.b16 %v468, %v468
    %v493 = vpack.c.b16 %v469, %v469
    %v494 = vpack.c.b16 %v470, %v470
    %v495 = vpack.c.b16 %v471, %v471
    %v904 = vunpack.c.l.b16 %v40
    %v905 = vunpack.c.h.b16 %v40
    %v906 = vunpack.c.l.b16 %v41
    %v907 = vunpack.c.h.b16 %v41
    %v908 = vunpack.c.l.b16 %v42
    %v909 = vunpack.c.h.b16 %v42
    %v910 = vunpack.c.l.b16 %v43
    %v911 = vunpack.c.h.b16 %v43
    %v912 = vunpack.c.l.b16 %v44
    %v913 = vunpack.c.h.b16 %v44
    %v914 = vunpack.c.l.b16 %v45
    %v915 = vunpack.c.h.b16 %v45
    %v916 = vunpack.c.l.b16 %v46
    %v917 = vunpack.c.h.b16 %v46
    %v918 = vunpack.c.l.b16 %v47
    %v919 = vunpack.c.h.b16 %v47
    %v920 = vunpack.c.l.b16 %v48
    %v921 = vunpack.c.h.b16 %v48
    %v922 = vunpack.c.l.b16 %v49
    %v923 = vunpack.c.h.b16 %v49
    %v924 = vunpack.c.l.b16 %v50
    %v925 = vunpack.c.h.b16 %v50
    %v926 = vunpack.c.l.b16 %v51
    %v927 = vunpack.c.h.b16 %v51
    %v928 = vunpack.c.l.b16 %v52
    %v929 = vunpack.c.h.b16 %v52
    %v930 = vunpack.c.l.b16 %v53
    %v931 = vunpack.c.h.b16 %v53
    %v932 = vunpack.c.l.b16 %v54
    %v933 = vunpack.c.h.b16 %v54
    %v934 = vunpack.c.l.b16 %v55
    %v935 = vunpack.c.h.b16 %v55
    %v936 = vunpack.c.l.b16 %v56
    %v937 = vunpack.c.h.b16 %v56
    %v938 = vunpack.c.l.b16 %v57
    %v939 = vunpack.c.h.b16 %v57
    %v940 = vunpack.c.l.b16 %v58
    %v941 = vunpack.c.h.b16 %v58
    %v942 = vunpack.c.l.b16 %v59
    %v943 = vunpack.c.h.b16 %v59
    %v944 = vunpack.c.l.b16 %v60
    %v945 = vunpack.c.h.b16 %v60
    %v946 = vunpack.c.l.b16 %v61
    %v947 = vunpack.c.h.b16 %v61
    %v948 = vunpack.c.l.b16 %v62
    %v949 = vunpack.c.h.b16 %v62
    %v950 = vunpack.c.l.b16 %v63
    %v951 = vunpack.c.h.b16 %v63
    %v952 = vunpack.c.l.b16 %v64
    %v953 = vunpack.c.h.b16 %v64
    %v954 = vunpack.c.l.b16 %v65
    %v955 = vunpack.c.h.b16 %v65
    %v956 = vunpack.c.l.b16 %v66
    %v957 = vunpack.c.h.b16 %v66
    %v958 = vunpack.c.l.b16 %v67
    %v959 = vunpack.c.h.b16 %v67
    %v960 = vunpack.c.l.b16 %v68
    %v961 = vunpack.c.h.b16 %v68
    %v962 = vunpack.c.l.b16 %v69
    %v963 = vunpack.c.h.b16 %v69
    %v964 = vunpack.c.l.b16 %v70
    %v965 = vunpack.c.h.b16 %v70
    %v966 = vunpack.c.l.b16 %v71
    %v967 = vunpack.c.h.b16 %v71
    %v968 = vunpack.c.l.b16 %v72
    %v969 = vunpack.c.h.b16 %v72
    %v970 = vunpack.c.l.b16 %v73
    %v971 = vunpack.c.h.b16 %v73
    %v972 = vunpack.c.l.b16 %v74
    %v973 = vunpack.c.h.b16 %v74
    %v974 = vunpack.c.l.b16 %v75
    %v975 = vunpack.c.h.b16 %v75
    %v976 = vunpack.c.l.b16 %v76
    %v977 = vunpack.c.h.b16 %v76
    %v978 = vunpack.c.l.b16 %v77
    %v979 = vunpack.c.h.b16 %v77
    %v980 = vunpack.c.l.b16 %v78
    %v981 = vunpack.c.h.b16 %v78
    %v982 = vunpack.c.l.b16 %v79
    %v983 = vunpack.c.h.b16 %v79
    %v984 = vunpack.c.l.b16 %v80
    %v985 = vunpack.c.h.b16 %v80
    %v986 = vunpack.c.l.b16 %v81
    %v987 = vunpack.c.h.b16 %v81
    %v988 = vunpack.c.l.b16 %v82
    %v989 = vunpack.c.h.b16 %v82
    %v990 = vunpack.c.l.b16 %v83
    %v991 = vunpack.c.h.b16 %v83
    %v992 = vunpack.c.l.b16 %v84
    %v993 = vunpack.c.h.b16 %v84
    %v994 = vunpack.c.l.b16 %v85
    %v995 = vunpack.c.h.b16 %v85
    %v996 = vunpack.c.l.b16 %v86
    %v997 = vunpack.c.h.b16 %v86
    %v998 = vunpack.c.l.b16 %v87
    %v999 = vunpack.c.h.b16 %v87
    %v1000 = vunpack.c.l.b16 %v88
    %v1001 = vunpack.c.h.b16 %v88
    %v1002 = vunpack.c.l.b16 %v89
    %v1003 = vunpack.c.h.b16 %v89
    %v1004 = vunpack.c.l.b16 %v90
    %v1005 = vunpack.c.h.b16 %v90
    %v1006 = vunpack.c.l.b16 %v91
    %v1007 = vunpack.c.h.b16 %v91
    %v1008 = vunpack.c.l.b16 %v92
    %v1009 = vunpack.c.h.b16 %v92
    %v1010 = vunpack.c.l.b16 %v93
    %v1011 = vunpack.c.h.b16 %v93
    %v1012 = vunpack.c.l.b16 %v94
    %v1013 = vunpack.c.h.b16 %v94
    %v1014 = vunpack.c.l.b16 %v95
    %v1015 = vunpack.c.h.b16 %v95
    %v1016 = vunpack.c.l.b16 %v96
    %v1017 = vunpack.c.h.b16 %v96
    %v1018 = vunpack.c.l.b16 %v97
    %v1019 = vunpack.c.h.b16 %v97
    %v1020 = vunpack.c.l.b16 %v98
    %v1021 = vunpack.c.h.b16 %v98
    %v1022 = vunpack.c.l.b16 %v99
    %v1023 = vunpack.c.h.b16 %v99
    %v1024 = vunpack.c.l.b16 %v100
    %v1025 = vunpack.c.h.b16 %v100
    %v1026 = vunpack.c.l.b16 %v101
    %v1027 = vunpack.c.h.b16 %v101
    %v1028 = vunpack.c.l.b16 %v102
    %v1029 = vunpack.c.h.b16 %v102
    %v1030 = vunpack.c.l.b16 %v103
    %v1031 = vunpack.c.h.b16 %v103
    %v1032 = vunpack.c.l.b16 %v104
    %v1033 = vunpack.c.h.b16 %v104
    %v1034 = vunpack.c.l.b16 %v105
    %v1035 = vunpack.c.h.b16 %v105
    %v1036 = vunpack.c.l.b16 %v106
    %v1037 = vunpack.c.h.b16 %v106
    %v1038 = vunpack.c.l.b16 %v107
    %v1039 = vunpack.c.h.b16 %v107
    %v1040 = vunpack.c.l.b16 %v108
    %v1041 = vunpack.c.h.b16 %v108
    %v1042 = vunpack.c.l.b16 %v109
    %v1043 = vunpack.c.h.b16 %v109
    %v1044 = vunpack.c.l.b16 %v110
    %v1045 = vunpack.c.h.b16 %v110
    %v1046 = vunpack.c.l.b16 %v111
    %v1047 = vunpack.c.h.b16 %v111
    %v1048 = vunpack.c.l.b16 %v112
    %v1049 = vunpack.c.h.b16 %v112
    %v1050 = vunpack.c.l.b16 %v113
    %v1051 = vunpack.c.h.b16 %v113
    %v1052 = vunpack.c.l.b16 %v114
    %v1053 = vunpack.c.h.b16 %v114
    %v1054 = vunpack.c.l.b16 %v115
    %v1055 = vunpack.c.h.b16 %v115
    %v1056 = vunpack.c.l.b16 %v116
    %v1057 = vunpack.c.h.b16 %v116
    %v1058 = vunpack.c.l.b16 %v117
    %v1059 = vunpack.c.h.b16 %v117
    %v1060 = vunpack.c.l.b16 %v118
    %v1061 = vunpack.c.h.b16 %v118
    %v1062 = vunpack.c.l.b16 %v119
    %v1063 = vunpack.c.h.b16 %v119
    %v1064 = vunpack.c.l.b16 %v120
    %v1065 = vunpack.c.h.b16 %v120
    %v1066 = vunpack.c.l.b16 %v121
    %v1067 = vunpack.c.h.b16 %v121
    %v1068 = vunpack.c.l.b16 %v122
    %v1069 = vunpack.c.h.b16 %v122
    %v1070 = vunpack.c.l.b16 %v123
    %v1071 = vunpack.c.h.b16 %v123
    %v1072 = vunpack.c.l.b16 %v124
    %v1073 = vunpack.c.h.b16 %v124
    %v1074 = vunpack.c.l.b16 %v125
    %v1075 = vunpack.c.h.b16 %v125
    %v1076 = vunpack.c.l.b16 %v126
    %v1077 = vunpack.c.h.b16 %v126
    %v1078 = vunpack.c.l.b16 %v127
    %v1079 = vunpack.c.h.b16 %v127
    %v1080 = vunpack.c.l.b16 %v128
    %v1081 = vunpack.c.h.b16 %v128
    %v1082 = vunpack.c.l.b16 %v129
    %v1083 = vunpack.c.h.b16 %v129
    %v1084 = vunpack.c.l.b16 %v130
    %v1085 = vunpack.c.h.b16 %v130
    %v1086 = vunpack.c.l.b16 %v131
    %v1087 = vunpack.c.h.b16 %v131
    %v1088 = vunpack.c.l.b16 %v132
    %v1089 = vunpack.c.h.b16 %v132
    %v1090 = vunpack.c.l.b16 %v133
    %v1091 = vunpack.c.h.b16 %v133
    %v1092 = vunpack.c.l.b16 %v134
    %v1093 = vunpack.c.h.b16 %v134
    %v1094 = vunpack.c.l.b16 %v135
    %v1095 = vunpack.c.h.b16 %v135
    %v1096 = vunpack.c.l.b16 %v136
    %v1097 = vunpack.c.h.b16 %v136
    %v1098 = vunpack.c.l.b16 %v137
    %v1099 = vunpack.c.h.b16 %v137
    %v1100 = vunpack.c.l.b16 %v138
    %v1101 = vunpack.c.h.b16 %v138
    %v1102 = vunpack.c.l.b16 %v139
    %v1103 = vunpack.c.h.b16 %v139
    %v1104 = vunpack.c.l.b16 %v140
    %v1105 = vunpack.c.h.b16 %v140
    %v1106 = vunpack.c.l.b16 %v141
    %v1107 = vunpack.c.h.b16 %v141
    %v1108 = vunpack.c.l.b16 %v142
    %v1109 = vunpack.c.h.b16 %v142
    %v1110 = vunpack.c.l.b16 %v143
    %v1111 = vunpack.c.h.b16 %v143
    %v1112 = vunpack.c.l.b16 %v144
    %v1113 = vunpack.c.h.b16 %v144
    %v1114 = vunpack.c.l.b16 %v145
    %v1115 = vunpack.c.h.b16 %v145
    %v1116 = vunpack.c.l.b16 %v146
    %v1117 = vunpack.c.h.b16 %v146
    %v1118 = vunpack.c.l.b16 %v147
    %v1119 = vunpack.c.h.b16 %v147
    %v1120 = vunpack.c.l.b16 %v148
    %v1121 = vunpack.c.h.b16 %v148
    %v1122 = vunpack.c.l.b16 %v149
    %v1123 = vunpack.c.h.b16 %v149
    %v1124 = vunpack.c.l.b16 %v150
    %v1125 = vunpack.c.h.b16 %v150
    %v1126 = vunpack.c.l.b16 %v151
    %v1127 = vunpack.c.h.b16 %v151
    %v1128 = vunpack.c.l.b16 %v152
    %v1129 = vunpack.c.h.b16 %v152
    %v1130 = vunpack.c.l.b16 %v153
    %v1131 = vunpack.c.h.b16 %v153
    %v1132 = vunpack.c.l.b16 %v154
    %v1133 = vunpack.c.h.b16 %v154
    %v1134 = vunpack.c.l.b16 %v155
    %v1135 = vunpack.c.h.b16 %v155
    %v1136 = vunpack.c.l.b16 %v156
    %v1137 = vunpack.c.h.b16 %v156
    %v1138 = vunpack.c.l.b16 %v157
    %v1139 = vunpack.c.h.b16 %v157
    %v1140 = vunpack.c.l.b16 %v158
    %v1141 = vunpack.c.h.b16 %v158
    %v1142 = vunpack.c.l.b16 %v159
    %v1143 = vunpack.c.h.b16 %v159
    %v1144 = vunpack.c.l.b16 %v160
    %v1145 = vunpack.c.h.b16 %v160
    %v1146 = vunpack.c.l.b16 %v161
    %v1147 = vunpack.c.h.b16 %v161
    %v1148 = vunpack.c.l.b16 %v162
    %v1149 = vunpack.c.h.b16 %v162
    %v1150 = vunpack.c.l.b16 %v163
    %v1151 = vunpack.c.h.b16 %v163
    %v1152 = vunpack.c.l.b16 %v164
    %v1153 = vunpack.c.h.b16 %v164
    %v1154 = vunpack.c.l.b16 %v165
    %v1155 = vunpack.c.h.b16 %v165
    %v1156 = vunpack.c.l.b16 %v166
    %v1157 = vunpack.c.h.b16 %v166
    %v1158 = vunpack.c.l.b16 %v167
    %v1159 = vunpack.c.h.b16 %v167
    %v1160 = vunpack.c.l.b16 %v168
    %v1161 = vunpack.c.h.b16 %v168
    %v1162 = vunpack.c.l.b16 %v169
    %v1163 = vunpack.c.h.b16 %v169
    %v1164 = vunpack.c.l.b16 %v170
    %v1165 = vunpack.c.h.b16 %v170
    %v1166 = vunpack.c.l.b16 %v171
    %v1167 = vunpack.c.h.b16 %v171
    %v1168 = vunpack.c.l.b16 %v172
    %v1169 = vunpack.c.h.b16 %v172
    %v1170 = vunpack.c.l.b16 %v173
    %v1171 = vunpack.c.h.b16 %v173
    %v1172 = vunpack.c.l.b16 %v174
    %v1173 = vunpack.c.h.b16 %v174
    %v1174 = vunpack.c.l.b16 %v175
    %v1175 = vunpack.c.h.b16 %v175
    %v1176 = vunpack.c.l.b16 %v176
    %v1177 = vunpack.c.h.b16 %v176
    %v1178 = vunpack.c.l.b16 %v177
    %v1179 = vunpack.c.h.b16 %v177
    %v1180 = vunpack.c.l.b16 %v178
    %v1181 = vunpack.c.h.b16 %v178
    %v1182 = vunpack.c.l.b16 %v179
    %v1183 = vunpack.c.h.b16 %v179
    %v1184 = vunpack.c.l.b16 %v180
    %v1185 = vunpack.c.h.b16 %v180
    %v1186 = vunpack.c.l.b16 %v181
    %v1187 = vunpack.c.h.b16 %v181
    %v1188 = vunpack.c.l.b16 %v182
    %v1189 = vunpack.c.h.b16 %v182
    %v1190 = vunpack.c.l.b16 %v183
    %v1191 = vunpack.c.h.b16 %v183
    %v1192 = vunpack.c.l.b16 %v184
    %v1193 = vunpack.c.h.b16 %v184
    %v1194 = vunpack.c.l.b16 %v185
    %v1195 = vunpack.c.h.b16 %v185
    %v1196 = vunpack.c.l.b16 %v186
    %v1197 = vunpack.c.h.b16 %v186
    %v1198 = vunpack.c.l.b16 %v187
    %v1199 = vunpack.c.h.b16 %v187
    %v1200 = vunpack.c.l.b16 %v188
    %v1201 = vunpack.c.h.b16 %v188
    %v1202 = vunpack.c.l.b16 %v189
    %v1203 = vunpack.c.h.b16 %v189
    %v1204 = vunpack.c.l.b16 %v190
    %v1205 = vunpack.c.h.b16 %v190
    %v1206 = vunpack.c.l.b16 %v191
    %v1207 = vunpack.c.h.b16 %v191
    %v1208 = vunpack.c.l.b16 %v192
    %v1209 = vunpack.c.h.b16 %v192
    %v1210 = vunpack.c.l.b16 %v193
    %v1211 = vunpack.c.h.b16 %v193
    %v1212 = vunpack.c.l.b16 %v194
    %v1213 = vunpack.c.h.b16 %v194
    %v1214 = vunpack.c.l.b16 %v195
    %v1215 = vunpack.c.h.b16 %v195
    %v1216 = vunpack.c.l.b16 %v196
    %v1217 = vunpack.c.h.b16 %v196
    %v1218 = vunpack.c.l.b16 %v197
    %v1219 = vunpack.c.h.b16 %v197
    %v1220 = vunpack.c.l.b16 %v198
    %v1221 = vunpack.c.h.b16 %v198
    %v1222 = vunpack.c.l.b16 %v199
    %v1223 = vunpack.c.h.b16 %v199
    %v1224 = vunpack.c.l.b16 %v200
    %v1225 = vunpack.c.h.b16 %v200
    %v1226 = vunpack.c.l.b16 %v201
    %v1227 = vunpack.c.h.b16 %v201
    %v1228 = vunpack.c.l.b16 %v202
    %v1229 = vunpack.c.h.b16 %v202
    %v1230 = vunpack.c.l.b16 %v203
    %v1231 = vunpack.c.h.b16 %v203
    %v1232 = vunpack.c.l.b16 %v204
    %v1233 = vunpack.c.h.b16 %v204
    %v1234 = vunpack.c.l.b16 %v205
    %v1235 = vunpack.c.h.b16 %v205
    %v1236 = vunpack.c.l.b16 %v206
    %v1237 = vunpack.c.h.b16 %v206
    %v1238 = vunpack.c.l.b16 %v207
    %v1239 = vunpack.c.h.b16 %v207
    %v1240 = vunpack.c.l.b16 %v208
    %v1241 = vunpack.c.h.b16 %v208
    %v1242 = vunpack.c.l.b16 %v209
    %v1243 = vunpack.c.h.b16 %v209
    %v1244 = vunpack.c.l.b16 %v210
    %v1245 = vunpack.c.h.b16 %v210
    %v1246 = vunpack.c.l.b16 %v211
    %v1247 = vunpack.c.h.b16 %v211
    %v1248 = vunpack.c.l.b16 %v212
    %v1249 = vunpack.c.h.b16 %v212
    %v1250 = vunpack.c.l.b16 %v213
    %v1251 = vunpack.c.h.b16 %v213
    %v1252 = vunpack.c.l.b16 %v214
    %v1253 = vunpack.c.h.b16 %v214
    %v1254 = vunpack.c.l.b16 %v215
    %v1255 = vunpack.c.h.b16 %v215
    %v1256 = vunpack.c.l.b16 %v216
    %v1257 = vunpack.c.h.b16 %v216
    %v1258 = vunpack.c.l.b16 %v217
    %v1259 = vunpack.c.h.b16 %v217
    %v1260 = vunpack.c.l.b16 %v218
    %v1261 = vunpack.c.h.b16 %v218
    %v1262 = vunpack.c.l.b16 %v219
    %v1263 = vunpack.c.h.b16 %v219
    %v1264 = vunpack.c.l.b16 %v220
    %v1265 = vunpack.c.h.b16 %v220
    %v1266 = vunpack.c.l.b16 %v221
    %v1267 = vunpack.c.h.b16 %v221
    %v1268 = vunpack.c.l.b16 %v222
    %v1269 = vunpack.c.h.b16 %v222
    %v1270 = vunpack.c.l.b16 %v223
    %v1271 = vunpack.c.h.b16 %v223
    %v1272 = vunpack.c.l.b16 %v224
    %v1273 = vunpack.c.h.b16 %v224
    %v1274 = vunpack.c.l.b16 %v225
    %v1275 = vunpack.c.h.b16 %v225
    %v1276 = vunpack.c.l.b16 %v226
    %v1277 = vunpack.c.h.b16 %v226
    %v1278 = vunpack.c.l.b16 %v227
    %v1279 = vunpack.c.h.b16 %v227
    %v1280 = vunpack.c.l.b16 %v228
    %v1281 = vunpack.c.h.b16 %v228
    %v1282 = vunpack.c.l.b16 %v229
    %v1283 = vunpack.c.h.b16 %v229
    %v1284 = vunpack.c.l.b16 %v230
    %v1285 = vunpack.c.h.b16 %v230
    %v1286 = vunpack.c.l.b16 %v231
    %v1287 = vunpack.c.h.b16 %v231
    %v1288 = vunpack.c.l.b16 %v232
    %v1289 = vunpack.c.h.b16 %v232
    %v1290 = vunpack.c.l.b16 %v233
    %v1291 = vunpack.c.h.b16 %v233
    %v1292 = vunpack.c.l.b16 %v234
    %v1293 = vunpack.c.h.b16 %v234
    %v1294 = vunpack.c.l.b16 %v235
    %v1295 = vunpack.c.h.b16 %v235
    %v1296 = vunpack.c.l.b16 %v236
    %v1297 = vunpack.c.h.b16 %v236
    %v1298 = vunpack.c.l.b16 %v237
    %v1299 = vunpack.c.h.b16 %v237
    %v1300 = vunpack.c.l.b16 %v238
    %v1301 = vunpack.c.h.b16 %v238
    %v1302 = vunpack.c.l.b16 %v239
    %v1303 = vunpack.c.h.b16 %v239
    %v1304 = vunpack.c.l.b16 %v240
    %v1305 = vunpack.c.h.b16 %v240
    %v1306 = vunpack.c.l.b16 %v241
    %v1307 = vunpack.c.h.b16 %v241
    %v1308 = vunpack.c.l.b16 %v242
    %v1309 = vunpack.c.h.b16 %v242
    %v1310 = vunpack.c.l.b16 %v243
    %v1311 = vunpack.c.h.b16 %v243
    %v1312 = vunpack.c.l.b16 %v244
    %v1313 = vunpack.c.h.b16 %v244
    %v1314 = vunpack.c.l.b16 %v245
    %v1315 = vunpack.c.h.b16 %v245
    %v1316 = vunpack.c.l.b16 %v246
    %v1317 = vunpack.c.h.b16 %v246
    %v1318 = vunpack.c.l.b16 %v247
    %v1319 = vunpack.c.h.b16 %v247
    %v1320 = vunpack.c.l.b16 %v248
    %v1321 = vunpack.c.h.b16 %v248
    %v1322 = vunpack.c.l.b16 %v249
    %v1323 = vunpack.c.h.b16 %v249
    %v1324 = vunpack.c.l.b16 %v250
    %v1325 = vunpack.c.h.b16 %v250
    %v1326 = vunpack.c.l.b16 %v251
    %v1327 = vunpack.c.h.b16 %v251
    %v1328 = vunpack.c.l.b16 %v252
    %v1329 = vunpack.c.h.b16 %v252
    %v1330 = vunpack.c.l.b16 %v253
    %v1331 = vunpack.c.h.b16 %v253
    %v1332 = vunpack.c.l.b16 %v254
    %v1333 = vunpack.c.h.b16 %v254
    %v1334 = vunpack.c.l.b16 %v255
    %v1335 = vunpack.c.h.b16 %v255
    %v1336 = vunpack.c.l.b16 %v256
    %v1337 = vunpack.c.h.b16 %v256
    %v1338 = vunpack.c.l.b16 %v257
    %v1339 = vunpack.c.h.b16 %v257
    %v1340 = vunpack.c.l.b16 %v258
    %v1341 = vunpack.c.h.b16 %v258
    %v1342 = vunpack.c.l.b16 %v259
    %v1343 = vunpack.c.h.b16 %v259
    %v1344 = vunpack.c.l.b16 %v260
    %v1345 = vunpack.c.h.b16 %v260
    %v1346 = vunpack.c.l.b16 %v261
    %v1347 = vunpack.c.h.b16 %v261
    %v1348 = vunpack.c.l.b16 %v262
    %v1349 = vunpack.c.h.b16 %v262
    %v1350 = vunpack.c.l.b16 %v263
    %v1351 = vunpack.c.h.b16 %v263
    %v1352 = vunpack.c.l.b16 %v264
    %v1353 = vunpack.c.h.b16 %v264
    %v1354 = vunpack.c.l.b16 %v265
    %v1355 = vunpack.c.h.b16 %v265
    %v1356 = vunpack.c.l.b16 %v266
    %v1357 = vunpack.c.h.b16 %v266
    %v1358 = vunpack.c.l.b16 %v267
    %v1359 = vunpack.c.h.b16 %v267
    %v1360 = vunpack.c.l.b16 %v268
    %v1361 = vunpack.c.h.b16 %v268
    %v1362 = vunpack.c.l.b16 %v269
    %v1363 = vunpack.c.h.b16 %v269
    %v1364 = vunpack.c.l.b16 %v270
    %v1365 = vunpack.c.h.b16 %v270
    %v1366 = vunpack.c.l.b16 %v271
    %v1367 = vunpack.c.h.b16 %v271
    %v1368 = vunpack.c.l.b16 %v272
    %v1369 = vunpack.c.h.b16 %v272
    %v1370 = vunpack.c.l.b16 %v273
    %v1371 = vunpack.c.h.b16 %v273
    %v1372 = vunpack.c.l.b16 %v274
    %v1373 = vunpack.c.h.b16 %v274
    %v1374 = vunpack.c.l.b16 %v275
    %v1375 = vunpack.c.h.b16 %v275
    %v1376 = vunpack.c.l.b16 %v276
    %v1377 = vunpack.c.h.b16 %v276
    %v1378 = vunpack.c.l.b16 %v277
    %v1379 = vunpack.c.h.b16 %v277
    %v1380 = vunpack.c.l.b16 %v278
    %v1381 = vunpack.c.h.b16 %v278
    %v1382 = vunpack.c.l.b16 %v279
    %v1383 = vunpack.c.h.b16 %v279
    %v1384 = vunpack.c.l.b16 %v280
    %v1385 = vunpack.c.h.b16 %v280
    %v1386 = vunpack.c.l.b16 %v281
    %v1387 = vunpack.c.h.b16 %v281
    %v1388 = vunpack.c.l.b16 %v282
    %v1389 = vunpack.c.h.b16 %v282
    %v1390 = vunpack.c.l.b16 %v283
    %v1391 = vunpack.c.h.b16 %v283
    %v1392 = vunpack.c.l.b16 %v284
    %v1393 = vunpack.c.h.b16 %v284
    %v1394 = vunpack.c.l.b16 %v285
    %v1395 = vunpack.c.h.b16 %v285
    %v1396 = vunpack.c.l.b16 %v286
    %v1397 = vunpack.c.h.b16 %v286
    %v1398 = vunpack.c.l.b16 %v287
    %v1399 = vunpack.c.h.b16 %v287
    %v1400 = vunpack.c.l.b16 %v288
    %v1401 = vunpack.c.h.b16 %v288
    %v1402 = vunpack.c.l.b16 %v289
    %v1403 = vunpack.c.h.b16 %v289
    %v1404 = vunpack.c.l.b16 %v290
    %v1405 = vunpack.c.h.b16 %v290
    %v1406 = vunpack.c.l.b16 %v291
    %v1407 = vunpack.c.h.b16 %v291
    %v1408 = vunpack.c.l.b16 %v292
    %v1409 = vunpack.c.h.b16 %v292
    %v1410 = vunpack.c.l.b16 %v293
    %v1411 = vunpack.c.h.b16 %v293
    %v1412 = vunpack.c.l.b16 %v294
    %v1413 = vunpack.c.h.b16 %v294
    %v1414 = vunpack.c.l.b16 %v295
    %v1415 = vunpack.c.h.b16 %v295
    %v1416 = vunpack.c.l.b16 %v296
    %v1417 = vunpack.c.h.b16 %v296
    %v1418 = vunpack.c.l.b16 %v297
    %v1419 = vunpack.c.h.b16 %v297
    %v1420 = vunpack.c.l.b16 %v298
    %v1421 = vunpack.c.h.b16 %v298
    %v1422 = vunpack.c.l.b16 %v299
    %v1423 = vunpack.c.h.b16 %v299
    %v1424 = vunpack.c.l.b16 %v300
    %v1425 = vunpack.c.h.b16 %v300
    %v1426 = vunpack.c.l.b16 %v301
    %v1427 = vunpack.c.h.b16 %v301
    %v1428 = vunpack.c.l.b16 %v302
    %v1429 = vunpack.c.h.b16 %v302
    %v1430 = vunpack.c.l.b16 %v303
    %v1431 = vunpack.c.h.b16 %v303
    %v1432 = vunpack.c.l.b16 %v304
    %v1433 = vunpack.c.h.b16 %v304
    %v1434 = vunpack.c.l.b16 %v305
    %v1435 = vunpack.c.h.b16 %v305
    %v1436 = vunpack.c.l.b16 %v306
    %v1437 = vunpack.c.h.b16 %v306
    %v1438 = vunpack.c.l.b16 %v307
    %v1439 = vunpack.c.h.b16 %v307
    %v1440 = vunpack.c.l.b16 %v308
    %v1441 = vunpack.c.h.b16 %v308
    %v1442 = vunpack.c.l.b16 %v309
    %v1443 = vunpack.c.h.b16 %v309
    %v1444 = vunpack.c.l.b16 %v310
    %v1445 = vunpack.c.h.b16 %v310
    %v1446 = vunpack.c.l.b16 %v311
    %v1447 = vunpack.c.h.b16 %v311
    %v1448 = vunpack.c.l.b16 %v312
    %v1449 = vunpack.c.h.b16 %v312
    %v1450 = vunpack.c.l.b16 %v313
    %v1451 = vunpack.c.h.b16 %v313
    %v1452 = vunpack.c.l.b16 %v314
    %v1453 = vunpack.c.h.b16 %v314
    %v1454 = vunpack.c.l.b16 %v315
    %v1455 = vunpack.c.h.b16 %v315
    %v1456 = vunpack.c.l.b16 %v316
    %v1457 = vunpack.c.h.b16 %v316
    %v1458 = vunpack.c.l.b16 %v317
    %v1459 = vunpack.c.h.b16 %v317
    %v1460 = vunpack.c.l.b16 %v318
    %v1461 = vunpack.c.h.b16 %v318
    %v1462 = vunpack.c.l.b16 %v319
    %v1463 = vunpack.c.h.b16 %v319
    %v1464 = vunpack.c.l.b16 %v320
    %v1465 = vunpack.c.h.b16 %v320
    %v1466 = vunpack.c.l.b16 %v321
    %v1467 = vunpack.c.h.b16 %v321
    %v1468 = vunpack.c.l.b16 %v322
    %v1469 = vunpack.c.h.b16 %v322
    %v1470 = vunpack.c.l.b16 %v323
    %v1471 = vunpack.c.h.b16 %v323
    %v1472 = vunpack.c.l.b16 %v324
    %v1473 = vunpack.c.h.b16 %v324
    %v1474 = vunpack.c.l.b16 %v325
    %v1475 = vunpack.c.h.b16 %v325
    %v1476 = vunpack.c.l.b16 %v326
    %v1477 = vunpack.c.h.b16 %v326
    %v1478 = vunpack.c.l.b16 %v327
    %v1479 = vunpack.c.h.b16 %v327
    %v1480 = vunpack.c.l.b16 %v328
    %v1481 = vunpack.c.h.b16 %v328
    %v1482 = vunpack.c.l.b16 %v329
    %v1483 = vunpack.c.h.b16 %v329
    %v1484 = vunpack.c.l.b16 %v330
    %v1485 = vunpack.c.h.b16 %v330
    %v1486 = vunpack.c.l.b16 %v331
    %v1487 = vunpack.c.h.b16 %v331
    %v1488 = vunpack.c.l.b16 %v332
    %v1489 = vunpack.c.h.b16 %v332
    %v1490 = vunpack.c.l.b16 %v333
    %v1491 = vunpack.c.h.b16 %v333
    %v1492 = vunpack.c.l.b16 %v334
    %v1493 = vunpack.c.h.b16 %v334
    %v1494 = vunpack.c.l.b16 %v335
    %v1495 = vunpack.c.h.b16 %v335
    %v1496 = vunpack.c.l.b16 %v336
    %v1497 = vunpack.c.h.b16 %v336
    %v1498 = vunpack.c.l.b16 %v337
    %v1499 = vunpack.c.h.b16 %v337
    %v1500 = vunpack.c.l.b16 %v338
    %v1501 = vunpack.c.h.b16 %v338
    %v1502 = vunpack.c.l.b16 %v339
    %v1503 = vunpack.c.h.b16 %v339
    %v1504 = vunpack.c.l.b16 %v340
    %v1505 = vunpack.c.h.b16 %v340
    %v1506 = vunpack.c.l.b16 %v341
    %v1507 = vunpack.c.h.b16 %v341
    %v1508 = vunpack.c.l.b16 %v342
    %v1509 = vunpack.c.h.b16 %v342
    %v1510 = vunpack.c.l.b16 %v343
    %v1511 = vunpack.c.h.b16 %v343
    %v1512 = vunpack.c.l.b16 %v344
    %v1513 = vunpack.c.h.b16 %v344
    %v1514 = vunpack.c.l.b16 %v345
    %v1515 = vunpack.c.h.b16 %v345
    %v1516 = vunpack.c.l.b16 %v346
    %v1517 = vunpack.c.h.b16 %v346
    %v1518 = vunpack.c.l.b16 %v347
    %v1519 = vunpack.c.h.b16 %v347
    %v1520 = vunpack.c.l.b16 %v348
    %v1521 = vunpack.c.h.b16 %v348
    %v1522 = vunpack.c.l.b16 %v349
    %v1523 = vunpack.c.h.b16 %v349
    %v1524 = vunpack.c.l.b16 %v350
    %v1525 = vunpack.c.h.b16 %v350
    %v1526 = vunpack.c.l.b16 %v351
    %v1527 = vunpack.c.h.b16 %v351
    %v1528 = vunpack.c.l.b16 %v352
    %v1529 = vunpack.c.h.b16 %v352
    %v1530 = vunpack.c.l.b16 %v353
    %v1531 = vunpack.c.h.b16 %v353
    %v1532 = vunpack.c.l.b16 %v354
    %v1533 = vunpack.c.h.b16 %v354
    %v1534 = vunpack.c.l.b16 %v355
    %v1535 = vunpack.c.h.b16 %v355
    %v1536 = vunpack.c.l.b16 %v356
    %v1537 = vunpack.c.h.b16 %v356
    %v1538 = vunpack.c.l.b16 %v357
    %v1539 = vunpack.c.h.b16 %v357
    %v1540 = vunpack.c.l.b16 %v358
    %v1541 = vunpack.c.h.b16 %v358
    %v1542 = vunpack.c.l.b16 %v359
    %v1543 = vunpack.c.h.b16 %v359
    %v1544 = vunpack.c.l.b16 %v360
    %v1545 = vunpack.c.h.b16 %v360
    %v1546 = vunpack.c.l.b16 %v361
    %v1547 = vunpack.c.h.b16 %v361
    %v1548 = vunpack.c.l.b16 %v362
    %v1549 = vunpack.c.h.b16 %v362
    %v1550 = vunpack.c.l.b16 %v363
    %v1551 = vunpack.c.h.b16 %v363
    %v1552 = vunpack.c.l.b16 %v364
    %v1553 = vunpack.c.h.b16 %v364
    %v1554 = vunpack.c.l.b16 %v365
    %v1555 = vunpack.c.h.b16 %v365
    %v1556 = vunpack.c.l.b16 %v366
    %v1557 = vunpack.c.h.b16 %v366
    %v1558 = vunpack.c.l.b16 %v367
    %v1559 = vunpack.c.h.b16 %v367
    %v1560 = vunpack.c.l.b16 %v368
    %v1561 = vunpack.c.h.b16 %v368
    %v1562 = vunpack.c.l.b16 %v369
    %v1563 = vunpack.c.h.b16 %v369
    %v1564 = vunpack.c.l.b16 %v370
    %v1565 = vunpack.c.h.b16 %v370
    %v1566 = vunpack.c.l.b16 %v371
    %v1567 = vunpack.c.h.b16 %v371
    %v1568 = vunpack.c.l.b16 %v372
    %v1569 = vunpack.c.h.b16 %v372
    %v1570 = vunpack.c.l.b16 %v373
    %v1571 = vunpack.c.h.b16 %v373
    %v1572 = vunpack.c.l.b16 %v374
    %v1573 = vunpack.c.h.b16 %v374
    %v1574 = vunpack.c.l.b16 %v375
    %v1575 = vunpack.c.h.b16 %v375
    %v1576 = vunpack.c.l.b16 %v376
    %v1577 = vunpack.c.h.b16 %v376
    %v1578 = vunpack.c.l.b16 %v377
    %v1579 = vunpack.c.h.b16 %v377
    %v1580 = vunpack.c.l.b16 %v378
    %v1581 = vunpack.c.h.b16 %v378
    %v1582 = vunpack.c.l.b16 %v379
    %v1583 = vunpack.c.h.b16 %v379
    %v1584 = vunpack.c.l.b16 %v380
    %v1585 = vunpack.c.h.b16 %v380
    %v1586 = vunpack.c.l.b16 %v381
    %v1587 = vunpack.c.h.b16 %v381
    %v1588 = vunpack.c.l.b16 %v382
    %v1589 = vunpack.c.h.b16 %v382
    %v1590 = vunpack.c.l.b16 %v383
    %v1591 = vunpack.c.h.b16 %v383
    %v1592 = vunpack.c.l.b16 %v384
    %v1593 = vunpack.c.h.b16 %v384
    %v1594 = vunpack.c.l.b16 %v385
    %v1595 = vunpack.c.h.b16 %v385
    %v1596 = vunpack.c.l.b16 %v386
    %v1597 = vunpack.c.h.b16 %v386
    %v1598 = vunpack.c.l.b16 %v387
    %v1599 = vunpack.c.h.b16 %v387
    %v1600 = vunpack.c.l.b16 %v388
    %v1601 = vunpack.c.h.b16 %v388
    %v1602 = vunpack.c.l.b16 %v389
    %v1603 = vunpack.c.h.b16 %v389
    %v1604 = vunpack.c.l.b16 %v390
    %v1605 = vunpack.c.h.b16 %v390
    %v1606 = vunpack.c.l.b16 %v391
    %v1607 = vunpack.c.h.b16 %v391
    %v1608 = vunpack.c.l.b16 %v392
    %v1609 = vunpack.c.h.b16 %v392
    %v1610 = vunpack.c.l.b16 %v393
    %v1611 = vunpack.c.h.b16 %v393
    %v1612 = vunpack.c.l.b16 %v394
    %v1613 = vunpack.c.h.b16 %v394
    %v1614 = vunpack.c.l.b16 %v395
    %v1615 = vunpack.c.h.b16 %v395
    %v1616 = vunpack.c.l.b16 %v396
    %v1617 = vunpack.c.h.b16 %v396
    %v1618 = vunpack.c.l.b16 %v397
    %v1619 = vunpack.c.h.b16 %v397
    %v1620 = vunpack.c.l.b16 %v398
    %v1621 = vunpack.c.h.b16 %v398
    %v1622 = vunpack.c.l.b16 %v399
    %v1623 = vunpack.c.h.b16 %v399
    %v1624 = vunpack.c.l.b16 %v400
    %v1625 = vunpack.c.h.b16 %v400
    %v1626 = vunpack.c.l.b16 %v401
    %v1627 = vunpack.c.h.b16 %v401
    %v1628 = vunpack.c.l.b16 %v402
    %v1629 = vunpack.c.h.b16 %v402
    %v1630 = vunpack.c.l.b16 %v403
    %v1631 = vunpack.c.h.b16 %v403
    %v1632 = vunpack.c.l.b16 %v404
    %v1633 = vunpack.c.h.b16 %v404
    %v1634 = vunpack.c.l.b16 %v405
    %v1635 = vunpack.c.h.b16 %v405
    %v1636 = vunpack.c.l.b16 %v406
    %v1637 = vunpack.c.h.b16 %v406
    %v1638 = vunpack.c.l.b16 %v407
    %v1639 = vunpack.c.h.b16 %v407
    %v1640 = vunpack.c.l.b16 %v408
    %v1641 = vunpack.c.h.b16 %v408
    %v1642 = vunpack.c.l.b16 %v409
    %v1643 = vunpack.c.h.b16 %v409
    %v1644 = vunpack.c.l.b16 %v410
    %v1645 = vunpack.c.h.b16 %v410
    %v1646 = vunpack.c.l.b16 %v411
    %v1647 = vunpack.c.h.b16 %v411
    %v1648 = vunpack.c.l.b16 %v412
    %v1649 = vunpack.c.h.b16 %v412
    %v1650 = vunpack.c.l.b16 %v413
    %v1651 = vunpack.c.h.b16 %v413
    %v1652 = vunpack.c.l.b16 %v414
    %v1653 = vunpack.c.h.b16 %v414
    %v1654 = vunpack.c.l.b16 %v415
    %v1655 = vunpack.c.h.b16 %v415
    %v1656 = vunpack.c.l.b16 %v416
    %v1657 = vunpack.c.h.b16 %v416
    %v1658 = vunpack.c.l.b16 %v417
    %v1659 = vunpack.c.h.b16 %v417
    %v1660 = vunpack.c.l.b16 %v418
    %v1661 = vunpack.c.h.b16 %v418
    %v1662 = vunpack.c.l.b16 %v419
    %v1663 = vunpack.c.h.b16 %v419
    %v1664 = vunpack.c.l.b16 %v420
    %v1665 = vunpack.c.h.b16 %v420
    %v1666 = vunpack.c.l.b16 %v421
    %v1667 = vunpack.c.h.b16 %v421
    %v1668 = vunpack.c.l.b16 %v422
    %v1669 = vunpack.c.h.b16 %v422
    %v1670 = vunpack.c.l.b16 %v423
    %v1671 = vunpack.c.h.b16 %v423
    %v1672 = vpack.c.b16 %v906, %v904
    %v1673 = vpack.c.b16 %v907, %v905
    %v1674 = vpack.c.b16 %v910, %v908
    %v1675 = vpack.c.b16 %v911, %v909
    %v1676 = vpack.c.b16 %v914, %v912
    %v1677 = vpack.c.b16 %v915, %v913
    %v1678 = vpack.c.b16 %v918, %v916
    %v1679 = vpack.c.b16 %v919, %v917
    %v1680 = vpack.c.b16 %v922, %v920
    %v1681 = vpack.c.b16 %v923, %v921
    %v1682 = vpack.c.b16 %v926, %v924
    %v1683 = vpack.c.b16 %v927, %v925
    %v1684 = vpack.c.b16 %v930, %v928
    %v1685 = vpack.c.b16 %v931, %v929
    %v1686 = vpack.c.b16 %v934, %v932
    %v1687 = vpack.c.b16 %v935, %v933
    %v1688 = vpack.c.b16 %v938, %v936
    %v1689 = vpack.c.b16 %v939, %v937
    %v1690 = vpack.c.b16 %v942, %v940
    %v1691 = vpack.c.b16 %v943, %v941
    %v1692 = vpack.c.b16 %v946, %v944
    %v1693 = vpack.c.b16 %v947, %v945
    %v1694 = vpack.c.b16 %v950, %v948
    %v1695 = vpack.c.b16 %v951, %v949
    %v1696 = vpack.c.b16 %v954, %v952
    %v1697 = vpack.c.b16 %v955, %v953
    %v1698 = vpack.c.b16 %v958, %v956
    %v1699 = vpack.c.b16 %v959, %v957
    %v1700 = vpack.c.b16 %v962, %v960
    %v1701 = vpack.c.b16 %v963, %v961
    %v1702 = vpack.c.b16 %v966, %v964
    %v1703 = vpack.c.b16 %v967, %v965
    %v1704 = vpack.c.b16 %v970, %v968
    %v1705 = vpack.c.b16 %v971, %v969
    %v1706 = vpack.c.b16 %v974, %v972
    %v1707 = vpack.c.b16 %v975, %v973
    %v1708 = vpack.c.b16 %v978, %v976
    %v1709 = vpack.c.b16 %v979, %v977
    %v1710 = vpack.c.b16 %v982, %v980
    %v1711 = vpack.c.b16 %v983, %v981
    %v1712 = vpack.c.b16 %v986, %v984
    %v1713 = vpack.c.b16 %v987, %v985
    %v1714 = vpack.c.b16 %v990, %v988
    %v1715 = vpack.c.b16 %v991, %v989
    %v1716 = vpack.c.b16 %v994, %v992
    %v1717 = vpack.c.b16 %v995, %v993
    %v1718 = vpack.c.b16 %v998, %v996
    %v1719 = vpack.c.b16 %v999, %v997
    %v1720 = vpack.c.b16 %v1002, %v1000
    %v1721 = vpack.c.b16 %v1003, %v1001
    %v1722 = vpack.c.b16 %v1006, %v1004
    %v1723 = vpack.c.b16 %v1007, %v1005
    %v1724 = vpack.c.b16 %v1010, %v1008
    %v1725 = vpack.c.b16 %v1011, %v1009
    %v1726 = vpack.c.b16 %v1014, %v1012
    %v1727 = vpack.c.b16 %v1015, %v1013
    %v1728 = vpack.c.b16 %v1018, %v1016
    %v1729 = vpack.c.b16 %v1019, %v1017
    %v1730 = vpack.c.b16 %v1022, %v1020
    %v1731 = vpack.c.b16 %v1023, %v1021
    %v1732 = vpack.c.b16 %v1026, %v1024
    %v1733 = vpack.c.b16 %v1027, %v1025
    %v1734 = vpack.c.b16 %v1030, %v1028
    %v1735 = vpack.c.b16 %v1031, %v1029
    %v1736 = vpack.c.b16 %v1034, %v1032
    %v1737 = vpack.c.b16 %v1035, %v1033
    %v1738 = vpack.c.b16 %v1038, %v1036
    %v1739 = vpack.c.b16 %v1039, %v1037
    %v1740 = vpack.c.b16 %v1042, %v1040
    %v1741 = vpack.c.b16 %v1043, %v1041
    %v1742 = vpack.c.b16 %v1046, %v1044
    %v1743 = vpack.c.b16 %v1047, %v1045
    %v1744 = vpack.c.b16 %v1050, %v1048
    %v1745 = vpack.c.b16 %v1051, %v1049
    %v1746 = vpack.c.b16 %v1054, %v1052
    %v1747 = vpack.c.b16 %v1055, %v1053
    %v1748 = vpack.c.b16 %v1058, %v1056
    %v1749 = vpack.c.b16 %v1059, %v1057
    %v1750 = vpack.c.b16 %v1062, %v1060
    %v1751 = vpack.c.b16 %v1063, %v1061
    %v1752 = vpack.c.b16 %v1066, %v1064
    %v1753 = vpack.c.b16 %v1067, %v1065
    %v1754 = vpack.c.b16 %v1070, %v1068
    %v1755 = vpack.c.b16 %v1071, %v1069
    %v1756 = vpack.c.b16 %v1074, %v1072
    %v1757 = vpack.c.b16 %v1075, %v1073
    %v1758 = vpack.c.b16 %v1078, %v1076
    %v1759 = vpack.c.b16 %v1079, %v1077
    %v1760 = vpack.c.b16 %v1082, %v1080
    %v1761 = vpack.c.b16 %v1083, %v1081
    %v1762 = vpack.c.b16 %v1086, %v1084
    %v1763 = vpack.c.b16 %v1087, %v1085
    %v1764 = vpack.c.b16 %v1090, %v1088
    %v1765 = vpack.c.b16 %v1091, %v1089
    %v1766 = vpack.c.b16 %v1094, %v1092
    %v1767 = vpack.c.b16 %v1095, %v1093
    %v1768 = vpack.c.b16 %v1098, %v1096
    %v1769 = vpack.c.b16 %v1099, %v1097
    %v1770 = vpack.c.b16 %v1102, %v1100
    %v1771 = vpack.c.b16 %v1103, %v1101
    %v1772 = vpack.c.b16 %v1106, %v1104
    %v1773 = vpack.c.b16 %v1107, %v1105
    %v1774 = vpack.c.b16 %v1110, %v1108
    %v1775 = vpack.c.b16 %v1111, %v1109
    %v1776 = vpack.c.b16 %v1114, %v1112
    %v1777 = vpack.c.b16 %v1115, %v1113
    %v1778 = vpack.c.b16 %v1118, %v1116
    %v1779 = vpack.c.b16 %v1119, %v1117
    %v1780 = vpack.c.b16 %v1122, %v1120
    %v1781 = vpack.c.b16 %v1123, %v1121
    %v1782 = vpack.c.b16 %v1126, %v1124
    %v1783 = vpack.c.b16 %v1127, %v1125
    %v1784 = vpack.c.b16 %v1130, %v1128
    %v1785 = vpack.c.b16 %v1131, %v1129
    %v1786 = vpack.c.b16 %v1134, %v1132
    %v1787 = vpack.c.b16 %v1135, %v1133
    %v1788 = vpack.c.b16 %v1138, %v1136
    %v1789 = vpack.c.b16 %v1139, %v1137
    %v1790 = vpack.c.b16 %v1142, %v1140
    %v1791 = vpack.c.b16 %v1143, %v1141
    %v1792 = vpack.c.b16 %v1146, %v1144
    %v1793 = vpack.c.b16 %v1147, %v1145
    %v1794 = vpack.c.b16 %v1150, %v1148
    %v1795 = vpack.c.b16 %v1151, %v1149
    %v1796 = vpack.c.b16 %v1154, %v1152
    %v1797 = vpack.c.b16 %v1155, %v1153
    %v1798 = vpack.c.b16 %v1158, %v1156
    %v1799 = vpack.c.b16 %v1159, %v1157
    %v1800 = vpack.c.b16 %v1162, %v1160
    %v1801 = vpack.c.b16 %v1163, %v1161
    %v1802 = vpack.c.b16 %v1166, %v1164
    %v1803 = vpack.c.b16 %v1167, %v1165
    %v1804 = vpack.c.b16 %v1170, %v1168
    %v1805 = vpack.c.b16 %v1171, %v1169
    %v1806 = vpack.c.b16 %v1174, %v1172
    %v1807 = vpack.c.b16 %v1175, %v1173
    %v1808 = vpack.c.b16 %v1178, %v1176
    %v1809 = vpack.c.b16 %v1179, %v1177
    %v1810 = vpack.c.b16 %v1182, %v1180
    %v1811 = vpack.c.b16 %v1183, %v1181
    %v1812 = vpack.c.b16 %v1186, %v1184
    %v1813 = vpack.c.b16 %v1187, %v1185
    %v1814 = vpack.c.b16 %v1190, %v1188
    %v1815 = vpack.c.b16 %v1191, %v1189
    %v1816 = vpack.c.b16 %v1194, %v1192
    %v1817 = vpack.c.b16 %v1195, %v1193
    %v1818 = vpack.c.b16 %v1198, %v1196
    %v1819 = vpack.c.b16 %v1199, %v1197
    %v1820 = vpack.c.b16 %v1202, %v1200
    %v1821 = vpack.c.b16 %v1203, %v1201
    %v1822 = vpack.c.b16 %v1206, %v1204
    %v1823 = vpack.c.b16 %v1207, %v1205
    %v1824 = vpack.c.b16 %v1210, %v1208
    %v1825 = vpack.c.b16 %v1211, %v1209
    %v1826 = vpack.c.b16 %v1214, %v1212
    %v1827 = vpack.c.b16 %v1215, %v1213
    %v1828 = vpack.c.b16 %v1218, %v1216
    %v1829 = vpack.c.b16 %v1219, %v1217
    %v1830 = vpack.c.b16 %v1222, %v1220
    %v1831 = vpack.c.b16 %v1223, %v1221
    %v1832 = vpack.c.b16 %v1226, %v1224
    %v1833 = vpack.c.b16 %v1227, %v1225
    %v1834 = vpack.c.b16 %v1230, %v1228
    %v1835 = vpack.c.b16 %v1231, %v1229
    %v1836 = vpack.c.b16 %v1234, %v1232
    %v1837 = vpack.c.b16 %v1235, %v1233
    %v1838 = vpack.c.b16 %v1238, %v1236
    %v1839 = vpack.c.b16 %v1239, %v1237
    %v1840 = vpack.c.b16 %v1242, %v1240
    %v1841 = vpack.c.b16 %v1243, %v1241
    %v1842 = vpack.c.b16 %v1246, %v1244
    %v1843 = vpack.c.b16 %v1247, %v1245
    %v1844 = vpack.c.b16 %v1250, %v1248
    %v1845 = vpack.c.b16 %v1251, %v1249
    %v1846 = vpack.c.b16 %v1254, %v1252
    %v1847 = vpack.c.b16 %v1255, %v1253
    %v1848 = vpack.c.b16 %v1258, %v1256
    %v1849 = vpack.c.b16 %v1259, %v1257
    %v1850 = vpack.c.b16 %v1262, %v1260
    %v1851 = vpack.c.b16 %v1263, %v1261
    %v1852 = vpack.c.b16 %v1266, %v1264
    %v1853 = vpack.c.b16 %v1267, %v1265
    %v1854 = vpack.c.b16 %v1270, %v1268
    %v1855 = vpack.c.b16 %v1271, %v1269
    %v1856 = vpack.c.b16 %v1274, %v1272
    %v1857 = vpack.c.b16 %v1275, %v1273
    %v1858 = vpack.c.b16 %v1278, %v1276
    %v1859 = vpack.c.b16 %v1279, %v1277
    %v1860 = vpack.c.b16 %v1282, %v1280
    %v1861 = vpack.c.b16 %v1283, %v1281
    %v1862 = vpack.c.b16 %v1286, %v1284
    %v1863 = vpack.c.b16 %v1287, %v1285
    %v1864 = vpack.c.b16 %v1290, %v1288
    %v1865 = vpack.c.b16 %v1291, %v1289
    %v1866 = vpack.c.b16 %v1294, %v1292
    %v1867 = vpack.c.b16 %v1295, %v1293
    %v1868 = vpack.c.b16 %v1298, %v1296
    %v1869 = vpack.c.b16 %v1299, %v1297
    %v1870 = vpack.c.b16 %v1302, %v1300
    %v1871 = vpack.c.b16 %v1303, %v1301
    %v1872 = vpack.c.b16 %v1306, %v1304
    %v1873 = vpack.c.b16 %v1307, %v1305
    %v1874 = vpack.c.b16 %v1310, %v1308
    %v1875 = vpack.c.b16 %v1311, %v1309
    %v1876 = vpack.c.b16 %v1314, %v1312
    %v1877 = vpack.c.b16 %v1315, %v1313
    %v1878 = vpack.c.b16 %v1318, %v1316
    %v1879 = vpack.c.b16 %v1319, %v1317
    %v1880 = vpack.c.b16 %v1322, %v1320
    %v1881 = vpack.c.b16 %v1323, %v1321
    %v1882 = vpack.c.b16 %v1326, %v1324
    %v1883 = vpack.c.b16 %v1327, %v1325
    %v1884 = vpack.c.b16 %v1330, %v1328
    %v1885 = vpack.c.b16 %v1331, %v1329
    %v1886 = vpack.c.b16 %v1334, %v1332
    %v1887 = vpack.c.b16 %v1335, %v1333
    %v1888 = vpack.c.b16 %v1338, %v1336
    %v1889 = vpack.c.b16 %v1339, %v1337
    %v1890 = vpack.c.b16 %v1342, %v1340
    %v1891 = vpack.c.b16 %v1343, %v1341
    %v1892 = vpack.c.b16 %v1346, %v1344
    %v1893 = vpack.c.b16 %v1347, %v1345
    %v1894 = vpack.c.b16 %v1350, %v1348
    %v1895 = vpack.c.b16 %v1351, %v1349
    %v1896 = vpack.c.b16 %v1354, %v1352
    %v1897 = vpack.c.b16 %v1355, %v1353
    %v1898 = vpack.c.b16 %v1358, %v1356
    %v1899 = vpack.c.b16 %v1359, %v1357
    %v1900 = vpack.c.b16 %v1362, %v1360
    %v1901 = vpack.c.b16 %v1363, %v1361
    %v1902 = vpack.c.b16 %v1366, %v1364
    %v1903 = vpack.c.b16 %v1367, %v1365
    %v1904 = vpack.c.b16 %v1370, %v1368
    %v1905 = vpack.c.b16 %v1371, %v1369
    %v1906 = vpack.c.b16 %v1374, %v1372
    %v1907 = vpack.c.b16 %v1375, %v1373
    %v1908 = vpack.c.b16 %v1378, %v1376
    %v1909 = vpack.c.b16 %v1379, %v1377
    %v1910 = vpack.c.b16 %v1382, %v1380
    %v1911 = vpack.c.b16 %v1383, %v1381
    %v1912 = vpack.c.b16 %v1386, %v1384
    %v1913 = vpack.c.b16 %v1387, %v1385
    %v1914 = vpack.c.b16 %v1390, %v1388
    %v1915 = vpack.c.b16 %v1391, %v1389
    %v1916 = vpack.c.b16 %v1394, %v1392
    %v1917 = vpack.c.b16 %v1395, %v1393
    %v1918 = vpack.c.b16 %v1398, %v1396
    %v1919 = vpack.c.b16 %v1399, %v1397
    %v1920 = vpack.c.b16 %v1402, %v1400
    %v1921 = vpack.c.b16 %v1403, %v1401
    %v1922 = vpack.c.b16 %v1406, %v1404
    %v1923 = vpack.c.b16 %v1407, %v1405
    %v1924 = vpack.c.b16 %v1410, %v1408
    %v1925 = vpack.c.b16 %v1411, %v1409
    %v1926 = vpack.c.b16 %v1414, %v1412
    %v1927 = vpack.c.b16 %v1415, %v1413
    %v1928 = vpack.c.b16 %v1418, %v1416
    %v1929 = vpack.c.b16 %v1419, %v1417
    %v1930 = vpack.c.b16 %v1422, %v1420
    %v1931 = vpack.c.b16 %v1423, %v1421
    %v1932 = vpack.c.b16 %v1426, %v1424
    %v1933 = vpack.c.b16 %v1427, %v1425
    %v1934 = vpack.c.b16 %v1430, %v1428
    %v1935 = vpack.c.b16 %v1431, %v1429
    %v1936 = vpack.c.b16 %v1434, %v1432
    %v1937 = vpack.c.b16 %v1435, %v1433
    %v1938 = vpack.c.b16 %v1438, %v1436
    %v1939 = vpack.c.b16 %v1439, %v1437
    %v1940 = vpack.c.b16 %v1442, %v1440
    %v1941 = vpack.c.b16 %v1443, %v1441
    %v1942 = vpack.c.b16 %v1446, %v1444
    %v1943 = vpack.c.b16 %v1447, %v1445
    %v1944 = vpack.c.b16 %v1450, %v1448
    %v1945 = vpack.c.b16 %v1451, %v1449
    %v1946 = vpack.c.b16 %v1454, %v1452
    %v1947 = vpack.c.b16 %v1455, %v1453
    %v1948 = vpack.c.b16 %v1458, %v1456
    %v1949 = vpack.c.b16 %v1459, %v1457
    %v1950 = vpack.c.b16 %v1462, %v1460
    %v1951 = vpack.c.b16 %v1463, %v1461
    %v1952 = vpack.c.b16 %v1466, %v1464
    %v1953 = vpack.c.b16 %v1467, %v1465
    %v1954 = vpack.c.b16 %v1470, %v1468
    %v1955 = vpack.c.b16 %v1471, %v1469
    %v1956 = vpack.c.b16 %v1474, %v1472
    %v1957 = vpack.c.b16 %v1475, %v1473
    %v1958 = vpack.c.b16 %v1478, %v1476
    %v1959 = vpack.c.b16 %v1479, %v1477
    %v1960 = vpack.c.b16 %v1482, %v1480
    %v1961 = vpack.c.b16 %v1483, %v1481
    %v1962 = vpack.c.b16 %v1486, %v1484
    %v1963 = vpack.c.b16 %v1487, %v1485
    %v1964 = vpack.c.b16 %v1490, %v1488
    %v1965 = vpack.c.b16 %v1491, %v1489
    %v1966 = vpack.c.b16 %v1494, %v1492
    %v1967 = vpack.c.b16 %v1495, %v1493
    %v1968 = vpack.c.b16 %v1498, %v1496
    %v1969 = vpack.c.b16 %v1499, %v1497
    %v1970 = vpack.c.b16 %v1502, %v1500
    %v1971 = vpack.c.b16 %v1503, %v1501
    %v1972 = vpack.c.b16 %v1506, %v1504
    %v1973 = vpack.c.b16 %v1507, %v1505
    %v1974 = vpack.c.b16 %v1510, %v1508
    %v1975 = vpack.c.b16 %v1511, %v1509
    %v1976 = vpack.c.b16 %v1514, %v1512
    %v1977 = vpack.c.b16 %v1515, %v1513
    %v1978 = vpack.c.b16 %v1518, %v1516
    %v1979 = vpack.c.b16 %v1519, %v1517
    %v1980 = vpack.c.b16 %v1522, %v1520
    %v1981 = vpack.c.b16 %v1523, %v1521
    %v1982 = vpack.c.b16 %v1526, %v1524
    %v1983 = vpack.c.b16 %v1527, %v1525
    %v1984 = vpack.c.b16 %v1530, %v1528
    %v1985 = vpack.c.b16 %v1531, %v1529
    %v1986 = vpack.c.b16 %v1534, %v1532
    %v1987 = vpack.c.b16 %v1535, %v1533
    %v1988 = vpack.c.b16 %v1538, %v1536
    %v1989 = vpack.c.b16 %v1539, %v1537
    %v1990 = vpack.c.b16 %v1542, %v1540
    %v1991 = vpack.c.b16 %v1543, %v1541
    %v1992 = vpack.c.b16 %v1546, %v1544
    %v1993 = vpack.c.b16 %v1547, %v1545
    %v1994 = vpack.c.b16 %v1550, %v1548
    %v1995 = vpack.c.b16 %v1551, %v1549
    %v1996 = vpack.c.b16 %v1554, %v1552
    %v1997 = vpack.c.b16 %v1555, %v1553
    %v1998 = vpack.c.b16 %v1558, %v1556
    %v1999 = vpack.c.b16 %v1559, %v1557
    %v2000 = vpack.c.b16 %v1562, %v1560
    %v2001 = vpack.c.b16 %v1563, %v1561
    %v2002 = vpack.c.b16 %v1566, %v1564
    %v2003 = vpack.c.b16 %v1567, %v1565
    %v2004 = vpack.c.b16 %v1570, %v1568
    %v2005 = vpack.c.b16 %v1571, %v1569
    %v2006 = vpack.c.b16 %v1574, %v1572
    %v2007 = vpack.c.b16 %v1575, %v1573
    %v2008 = vpack.c.b16 %v1578, %v1576
    %v2009 = vpack.c.b16 %v1579, %v1577
    %v2010 = vpack.c.b16 %v1582, %v1580
    %v2011 = vpack.c.b16 %v1583, %v1581
    %v2012 = vpack.c.b16 %v1586, %v1584
    %v2013 = vpack.c.b16 %v1587, %v1585
    %v2014 = vpack.c.b16 %v1590, %v1588
    %v2015 = vpack.c.b16 %v1591, %v1589
    %v2016 = vpack.c.b16 %v1594, %v1592
    %v2017 = vpack.c.b16 %v1595, %v1593
    %v2018 = vpack.c.b16 %v1598, %v1596
    %v2019 = vpack.c.b16 %v1599, %v1597
    %v2020 = vpack.c.b16 %v1602, %v1600
    %v2021 = vpack.c.b16 %v1603, %v1601
    %v2022 = vpack.c.b16 %v1606, %v1604
    %v2023 = vpack.c.b16 %v1607, %v1605
    %v2024 = vpack.c.b16 %v1610, %v1608
    %v2025 = vpack.c.b16 %v1611, %v1609
    %v2026 = vpack.c.b16 %v1614, %v1612
    %v2027 = vpack.c.b16 %v1615, %v1613
    %v2028 = vpack.c.b16 %v1618, %v1616
    %v2029 = vpack.c.b16 %v1619, %v1617
    %v2030 = vpack.c.b16 %v1622, %v1620
    %v2031 = vpack.c.b16 %v1623, %v1621
    %v2032 = vpack.c.b16 %v1626, %v1624
    %v2033 = vpack.c.b16 %v1627, %v1625
    %v2034 = vpack.c.b16 %v1630, %v1628
    %v2035 = vpack.c.b16 %v1631, %v1629
    %v2036 = vpack.c.b16 %v1634, %v1632
    %v2037 = vpack.c.b16 %v1635, %v1633
    %v2038 = vpack.c.b16 %v1638, %v1636
    %v2039 = vpack.c.b16 %v1639, %v1637
    %v2040 = vpack.c.b16 %v1642, %v1640
    %v2041 = vpack.c.b16 %v1643, %v1641
    %v2042 = vpack.c.b16 %v1646, %v1644
    %v2043 = vpack.c.b16 %v1647, %v1645
    %v2044 = vpack.c.b16 %v1650, %v1648
    %v2045 = vpack.c.b16 %v1651, %v1649
    %v2046 = vpack.c.b16 %v1654, %v1652
    %v2047 = vpack.c.b16 %v1655, %v1653
    %v2048 = vpack.c.b16 %v1658, %v1656
    %v2049 = vpack.c.b16 %v1659, %v1657
    %v2050 = vpack.c.b16 %v1662, %v1660
    %v2051 = vpack.c.b16 %v1663, %v1661
    %v2052 = vpack.c.b16 %v1666, %v1664
    %v2053 = vpack.c.b16 %v1667, %v1665
    %v2054 = vpack.c.b16 %v1670, %v1668
    %v2055 = vpack.c.b16 %v1671, %v1669
    %2440 = vmatprep.subr.bf16.mxu0 %v1673
    %2441 = vmatpush1.bf16.msra.mxu0 %v1672
    %2442 = vmatprep.subr.bf16.mxu0 %v1675
    %2443 = vmatpush1.bf16.msra.mxu0 %v1674
    %2444 = vmatprep.subr.bf16.mxu0 %v1677
    %2445 = vmatpush1.bf16.msra.mxu0 %v1676
    %2446 = vmatprep.subr.bf16.mxu0 %v1679
    %2447 = vmatpush1.bf16.msra.mxu0 %v1678
    %2448 = vmatprep.subr.bf16.mxu0 %v1681
    %2449 = vmatpush1.bf16.msra.mxu0 %v1680
    %2450 = vmatprep.subr.bf16.mxu0 %v1683
    %2451 = vmatpush1.bf16.msra.mxu0 %v1682
    %2452 = vmatprep.subr.bf16.mxu0 %v1685
    %2453 = vmatpush1.bf16.msra.mxu0 %v1684
    %2454 = vmatprep.subr.bf16.mxu0 %v1687
    %2455 = vmatpush1.bf16.msra.mxu0 %v1686
    %2456 = vmatprep.subr.bf16.mxu0 %v1689
    %2457 = vmatpush1.bf16.msra.mxu0 %v1688
    %2458 = vmatprep.subr.bf16.mxu0 %v1691
    %2459 = vmatpush1.bf16.msra.mxu0 %v1690
    %2460 = vmatprep.subr.bf16.mxu0 %v1693
    %2461 = vmatpush1.bf16.msra.mxu0 %v1692
    %2462 = vmatprep.subr.bf16.mxu0 %v1695
    %2463 = vmatpush1.bf16.msra.mxu0 %v1694
    %2464 = vmatprep.subr.bf16.mxu0 %v1697
    %2465 = vmatpush1.bf16.msra.mxu0 %v1696
    %2466 = vmatprep.subr.bf16.mxu0 %v1699
    %2467 = vmatpush1.bf16.msra.mxu0 %v1698
    %2468 = vmatprep.subr.bf16.mxu0 %v1701
    %2469 = vmatpush1.bf16.msra.mxu0 %v1700
    %2470 = vmatprep.subr.bf16.mxu0 %v1703
    %2471 = vmatpush1.bf16.msra.mxu0 %v1702
    %2472 = vmatprep.mubr.bf16.mxu0 %v473
    %2473 = vmatmul.mubr.bf16.gmra.mrb[0].mxu0 %v472
    %v2474 = vpop.f32.mrb[0].mxu0
    %v2475 = vadd.f32 %v429, %v2474
    %v2476 = vpop.f32.mrb[0].mxu0
    %v2477 = vadd.f32 %v433, %v2476
    %v2478 = vpop.f32.mrb[0].mxu0
    %v2479 = vpop.f32.mrb[0].mxu0
    %2480 = vdwg.mxu0
    %2481 = vmatprep.subr.bf16.mxu0 %v1705
    %2482 = vmatpush1.bf16.msra.mxu0 %v1704
    %2483 = vmatprep.subr.bf16.mxu0 %v1707
    %2484 = vmatpush1.bf16.msra.mxu0 %v1706
    %2485 = vmatprep.subr.bf16.mxu0 %v1709
    %2486 = vmatpush1.bf16.msra.mxu0 %v1708
    %2487 = vmatprep.subr.bf16.mxu0 %v1711
    %2488 = vmatpush1.bf16.msra.mxu0 %v1710
    %2489 = vmatprep.subr.bf16.mxu0 %v1713
    %2490 = vmatpush1.bf16.msra.mxu0 %v1712
    %2491 = vmatprep.subr.bf16.mxu0 %v1715
    %2492 = vmatpush1.bf16.msra.mxu0 %v1714
    %2493 = vmatprep.subr.bf16.mxu0 %v1717
    %2494 = vmatpush1.bf16.msra.mxu0 %v1716
    %2495 = vmatprep.subr.bf16.mxu0 %v1719
    %2496 = vmatpush1.bf16.msra.mxu0 %v1718
    %2497 = vmatprep.subr.bf16.mxu0 %v1721
    %2498 = vmatpush1.bf16.msra.mxu0 %v1720
    %2499 = vmatprep.subr.bf16.mxu0 %v1723
    %2500 = vmatpush1.bf16.msra.mxu0 %v1722
    %2501 = vmatprep.subr.bf16.mxu0 %v1725
    %2502 = vmatpush1.bf16.msra.mxu0 %v1724
    %2503 = vmatprep.subr.bf16.mxu0 %v1727
    %2504 = vmatpush1.bf16.msra.mxu0 %v1726
    %2505 = vmatprep.subr.bf16.mxu0 %v1729
    %2506 = vmatpush1.bf16.msra.mxu0 %v1728
    %2507 = vmatprep.subr.bf16.mxu0 %v1731
    %2508 = vmatpush1.bf16.msra.mxu0 %v1730
    %2509 = vmatprep.subr.bf16.mxu0 %v1733
    %2510 = vmatpush1.bf16.msra.mxu0 %v1732
    %2511 = vmatprep.subr.bf16.mxu0 %v1735
    %2512 = vmatpush1.bf16.msra.mxu0 %v1734
    %2513 = vmatprep.mubr.bf16.mxu0 %v475
    %2514 = vmatmul.mubr.bf16.gmra.mrb[0].mxu0 %v474
    %v2515 = vpop.f32.mrb[0].mxu0
    %v2516 = vadd.f32 %v2475, %v2515
    %v2517 = vpop.f32.mrb[0].mxu0
    %v2518 = vadd.f32 %v2477, %v2517
    %v2519 = vpop.f32.mrb[0].mxu0
    %v2520 = vpop.f32.mrb[0].mxu0
    %2521 = vdwg.mxu0
    %2522 = vmatprep.subr.bf16.mxu0 %v1737
    %2523 = vmatpush1.bf16.msra.mxu0 %v1736
    %2524 = vmatprep.subr.bf16.mxu0 %v1739
    %2525 = vmatpush1.bf16.msra.mxu0 %v1738
    %2526 = vmatprep.subr.bf16.mxu0 %v1741
    %2527 = vmatpush1.bf16.msra.mxu0 %v1740
    %2528 = vmatprep.subr.bf16.mxu0 %v1743
    %2529 = vmatpush1.bf16.msra.mxu0 %v1742
    %2530 = vmatprep.subr.bf16.mxu0 %v1745
    %2531 = vmatpush1.bf16.msra.mxu0 %v1744
    %2532 = vmatprep.subr.bf16.mxu0 %v1747
    %2533 = vmatpush1.bf16.msra.mxu0 %v1746
    %2534 = vmatprep.subr.bf16.mxu0 %v1749
    %2535 = vmatpush1.bf16.msra.mxu0 %v1748
    %2536 = vmatprep.subr.bf16.mxu0 %v1751
    %2537 = vmatpush1.bf16.msra.mxu0 %v1750
    %2538 = vmatprep.subr.bf16.mxu0 %v1753
    %2539 = vmatpush1.bf16.msra.mxu0 %v1752
    %2540 = vmatprep.subr.bf16.mxu0 %v1755
    %2541 = vmatpush1.bf16.msra.mxu0 %v1754
    %2542 = vmatprep.subr.bf16.mxu0 %v1757
    %2543 = vmatpush1.bf16.msra.mxu0 %v1756
    %2544 = vmatprep.subr.bf16.mxu0 %v1759
    %2545 = vmatpush1.bf16.msra.mxu0 %v1758
    %2546 = vmatprep.subr.bf16.mxu0 %v1761
    %2547 = vmatpush1.bf16.msra.mxu0 %v1760
    %2548 = vmatprep.subr.bf16.mxu0 %v1763
    %2549 = vmatpush1.bf16.msra.mxu0 %v1762
    %2550 = vmatprep.subr.bf16.mxu0 %v1765
    %2551 = vmatpush1.bf16.msra.mxu0 %v1764
    %2552 = vmatprep.subr.bf16.mxu0 %v1767
    %2553 = vmatpush1.bf16.msra.mxu0 %v1766
    %2554 = vmatprep.mubr.bf16.mxu0 %v477
    %2555 = vmatmul.mubr.bf16.gmra.mrb[0].mxu0 %v476
    %v2556 = vpop.f32.mrb[0].mxu0
    %v2557 = vadd.f32 %v2516, %v2556
    %v2558 = vpop.f32.mrb[0].mxu0
    %v2559 = vadd.f32 %v2518, %v2558
    %v2560 = vpop.f32.mrb[0].mxu0
    %v2561 = vpop.f32.mrb[0].mxu0
    %2562 = vdwg.mxu0
    %2563 = vmatprep.subr.bf16.mxu0 %v1769
    %2564 = vmatpush1.bf16.msra.mxu0 %v1768
    %2565 = vmatprep.subr.bf16.mxu0 %v1771
    %2566 = vmatpush1.bf16.msra.mxu0 %v1770
    %2567 = vmatprep.subr.bf16.mxu0 %v1773
    %2568 = vmatpush1.bf16.msra.mxu0 %v1772
    %2569 = vmatprep.subr.bf16.mxu0 %v1775
    %2570 = vmatpush1.bf16.msra.mxu0 %v1774
    %2571 = vmatprep.subr.bf16.mxu0 %v1777
    %2572 = vmatpush1.bf16.msra.mxu0 %v1776
    %2573 = vmatprep.subr.bf16.mxu0 %v1779
    %2574 = vmatpush1.bf16.msra.mxu0 %v1778
    %2575 = vmatprep.subr.bf16.mxu0 %v1781
    %2576 = vmatpush1.bf16.msra.mxu0 %v1780
    %2577 = vmatprep.subr.bf16.mxu0 %v1783
    %2578 = vmatpush1.bf16.msra.mxu0 %v1782
    %2579 = vmatprep.subr.bf16.mxu0 %v1785
    %2580 = vmatpush1.bf16.msra.mxu0 %v1784
    %2581 = vmatprep.subr.bf16.mxu0 %v1787
    %2582 = vmatpush1.bf16.msra.mxu0 %v1786
    %2583 = vmatprep.subr.bf16.mxu0 %v1789
    %2584 = vmatpush1.bf16.msra.mxu0 %v1788
    %2585 = vmatprep.subr.bf16.mxu0 %v1791
    %2586 = vmatpush1.bf16.msra.mxu0 %v1790
    %2587 = vmatprep.subr.bf16.mxu0 %v1793
    %2588 = vmatpush1.bf16.msra.mxu0 %v1792
    %2589 = vmatprep.subr.bf16.mxu0 %v1795
    %2590 = vmatpush1.bf16.msra.mxu0 %v1794
    %2591 = vmatprep.subr.bf16.mxu0 %v1797
    %2592 = vmatpush1.bf16.msra.mxu0 %v1796
    %2593 = vmatprep.subr.bf16.mxu0 %v1799
    %2594 = vmatpush1.bf16.msra.mxu0 %v1798
    %2595 = vmatprep.mubr.bf16.mxu0 %v479
    %2596 = vmatmul.mubr.bf16.gmra.mrb[0].mxu0 %v478
    %v2597 = vpop.f32.mrb[0].mxu0
    %v2598 = vadd.f32 %v2557, %v2597
    %v2599 = vpop.f32.mrb[0].mxu0
    %v2600 = vadd.f32 %v2559, %v2599
    %v2601 = vpop.f32.mrb[0].mxu0
    %v2602 = vpop.f32.mrb[0].mxu0
    %2603 = vdwg.mxu0
    %2604 = vmatprep.subr.bf16.mxu0 %v1801
    %2605 = vmatpush1.bf16.msra.mxu0 %v1800
    %2606 = vmatprep.subr.bf16.mxu0 %v1803
    %2607 = vmatpush1.bf16.msra.mxu0 %v1802
    %2608 = vmatprep.subr.bf16.mxu0 %v1805
    %2609 = vmatpush1.bf16.msra.mxu0 %v1804
    %2610 = vmatprep.subr.bf16.mxu0 %v1807
    %2611 = vmatpush1.bf16.msra.mxu0 %v1806
    %2612 = vmatprep.subr.bf16.mxu0 %v1809
    %2613 = vmatpush1.bf16.msra.mxu0 %v1808
    %2614 = vmatprep.subr.bf16.mxu0 %v1811
    %2615 = vmatpush1.bf16.msra.mxu0 %v1810
    %2616 = vmatprep.subr.bf16.mxu0 %v1813
    %2617 = vmatpush1.bf16.msra.mxu0 %v1812
    %2618 = vmatprep.subr.bf16.mxu0 %v1815
    %2619 = vmatpush1.bf16.msra.mxu0 %v1814
    %2620 = vmatprep.subr.bf16.mxu0 %v1817
    %2621 = vmatpush1.bf16.msra.mxu0 %v1816
    %2622 = vmatprep.subr.bf16.mxu0 %v1819
    %2623 = vmatpush1.bf16.msra.mxu0 %v1818
    %2624 = vmatprep.subr.bf16.mxu0 %v1821
    %2625 = vmatpush1.bf16.msra.mxu0 %v1820
    %2626 = vmatprep.subr.bf16.mxu0 %v1823
    %2627 = vmatpush1.bf16.msra.mxu0 %v1822
    %2628 = vmatprep.subr.bf16.mxu0 %v1825
    %2629 = vmatpush1.bf16.msra.mxu0 %v1824
    %2630 = vmatprep.subr.bf16.mxu0 %v1827
    %2631 = vmatpush1.bf16.msra.mxu0 %v1826
    %2632 = vmatprep.subr.bf16.mxu0 %v1829
    %2633 = vmatpush1.bf16.msra.mxu0 %v1828
    %2634 = vmatprep.subr.bf16.mxu0 %v1831
    %2635 = vmatpush1.bf16.msra.mxu0 %v1830
    %2636 = vmatprep.mubr.bf16.mxu0 %v481
    %2637 = vmatmul.mubr.bf16.gmra.mrb[0].mxu0 %v480
    %v2638 = vpop.f32.mrb[0].mxu0
    %v2639 = vadd.f32 %v2598, %v2638
    %v2640 = vpop.f32.mrb[0].mxu0
    %v2641 = vadd.f32 %v2600, %v2640
    %v2642 = vpop.f32.mrb[0].mxu0
    %v2643 = vpop.f32.mrb[0].mxu0
    %2644 = vdwg.mxu0
    %2645 = vmatprep.subr.bf16.mxu0 %v1833
    %2646 = vmatpush1.bf16.msra.mxu0 %v1832
    %2647 = vmatprep.subr.bf16.mxu0 %v1835
    %2648 = vmatpush1.bf16.msra.mxu0 %v1834
    %2649 = vmatprep.subr.bf16.mxu0 %v1837
    %2650 = vmatpush1.bf16.msra.mxu0 %v1836
    %2651 = vmatprep.subr.bf16.mxu0 %v1839
    %2652 = vmatpush1.bf16.msra.mxu0 %v1838
    %2653 = vmatprep.subr.bf16.mxu0 %v1841
    %2654 = vmatpush1.bf16.msra.mxu0 %v1840
    %2655 = vmatprep.subr.bf16.mxu0 %v1843
    %2656 = vmatpush1.bf16.msra.mxu0 %v1842
    %2657 = vmatprep.subr.bf16.mxu0 %v1845
    %2658 = vmatpush1.bf16.msra.mxu0 %v1844
    %2659 = vmatprep.subr.bf16.mxu0 %v1847
    %2660 = vmatpush1.bf16.msra.mxu0 %v1846
    %2661 = vmatprep.subr.bf16.mxu0 %v1849
    %2662 = vmatpush1.bf16.msra.mxu0 %v1848
    %2663 = vmatprep.subr.bf16.mxu0 %v1851
    %2664 = vmatpush1.bf16.msra.mxu0 %v1850
    %2665 = vmatprep.subr.bf16.mxu0 %v1853
    %2666 = vmatpush1.bf16.msra.mxu0 %v1852
    %2667 = vmatprep.subr.bf16.mxu0 %v1855
    %2668 = vmatpush1.bf16.msra.mxu0 %v1854
    %2669 = vmatprep.subr.bf16.mxu0 %v1857
    %2670 = vmatpush1.bf16.msra.mxu0 %v1856
    %2671 = vmatprep.subr.bf16.mxu0 %v1859
    %2672 = vmatpush1.bf16.msra.mxu0 %v1858
    %2673 = vmatprep.subr.bf16.mxu0 %v1861
    %2674 = vmatpush1.bf16.msra.mxu0 %v1860
    %2675 = vmatprep.subr.bf16.mxu0 %v1863
    %2676 = vmatpush1.bf16.msra.mxu0 %v1862
    %2677 = vmatprep.mubr.bf16.mxu0 %v483
    %2678 = vmatmul.mubr.bf16.gmra.mrb[0].mxu0 %v482
    %v2679 = vpop.f32.mrb[0].mxu0
    %v2680 = vadd.f32 %v2639, %v2679
    %v2681 = vpop.f32.mrb[0].mxu0
    %v2682 = vadd.f32 %v2641, %v2681
    %v2683 = vpop.f32.mrb[0].mxu0
    %v2684 = vpop.f32.mrb[0].mxu0
    %2685 = vdwg.mxu0
    %2686 = vmatprep.subr.bf16.mxu0 %v1865
    %2687 = vmatpush1.bf16.msra.mxu0 %v1864
    %2688 = vmatprep.subr.bf16.mxu0 %v1867
    %2689 = vmatpush1.bf16.msra.mxu0 %v1866
    %2690 = vmatprep.subr.bf16.mxu0 %v1869
    %2691 = vmatpush1.bf16.msra.mxu0 %v1868
    %2692 = vmatprep.subr.bf16.mxu0 %v1871
    %2693 = vmatpush1.bf16.msra.mxu0 %v1870
    %2694 = vmatprep.subr.bf16.mxu0 %v1873
    %2695 = vmatpush1.bf16.msra.mxu0 %v1872
    %2696 = vmatprep.subr.bf16.mxu0 %v1875
    %2697 = vmatpush1.bf16.msra.mxu0 %v1874
    %2698 = vmatprep.subr.bf16.mxu0 %v1877
    %2699 = vmatpush1.bf16.msra.mxu0 %v1876
    %2700 = vmatprep.subr.bf16.mxu0 %v1879
    %2701 = vmatpush1.bf16.msra.mxu0 %v1878
    %2702 = vmatprep.subr.bf16.mxu0 %v1881
    %2703 = vmatpush1.bf16.msra.mxu0 %v1880
    %2704 = vmatprep.subr.bf16.mxu0 %v1883
    %2705 = vmatpush1.bf16.msra.mxu0 %v1882
    %2706 = vmatprep.subr.bf16.mxu0 %v1885
    %2707 = vmatpush1.bf16.msra.mxu0 %v1884
    %2708 = vmatprep.subr.bf16.mxu0 %v1887
    %2709 = vmatpush1.bf16.msra.mxu0 %v1886
    %2710 = vmatprep.subr.bf16.mxu0 %v1889
    %2711 = vmatpush1.bf16.msra.mxu0 %v1888
    %2712 = vmatprep.subr.bf16.mxu0 %v1891
    %2713 = vmatpush1.bf16.msra.mxu0 %v1890
    %2714 = vmatprep.subr.bf16.mxu0 %v1893
    %2715 = vmatpush1.bf16.msra.mxu0 %v1892
    %2716 = vmatprep.subr.bf16.mxu0 %v1895
    %2717 = vmatpush1.bf16.msra.mxu0 %v1894
    %2718 = vmatprep.mubr.bf16.mxu0 %v485
    %2719 = vmatmul.mubr.bf16.gmra.mrb[0].mxu0 %v484
    %v2720 = vpop.f32.mrb[0].mxu0
    %v2721 = vadd.f32 %v2680, %v2720
    %v2722 = vpop.f32.mrb[0].mxu0
    %v2723 = vadd.f32 %v2682, %v2722
    %v2724 = vpop.f32.mrb[0].mxu0
    %v2725 = vpop.f32.mrb[0].mxu0
    %2726 = vdwg.mxu0
    %2727 = vmatprep.subr.bf16.mxu0 %v1897
    %2728 = vmatpush1.bf16.msra.mxu0 %v1896
    %2729 = vmatprep.subr.bf16.mxu0 %v1899
    %2730 = vmatpush1.bf16.msra.mxu0 %v1898
    %2731 = vmatprep.subr.bf16.mxu0 %v1901
    %2732 = vmatpush1.bf16.msra.mxu0 %v1900
    %2733 = vmatprep.subr.bf16.mxu0 %v1903
    %2734 = vmatpush1.bf16.msra.mxu0 %v1902
    %2735 = vmatprep.subr.bf16.mxu0 %v1905
    %2736 = vmatpush1.bf16.msra.mxu0 %v1904
    %2737 = vmatprep.subr.bf16.mxu0 %v1907
    %2738 = vmatpush1.bf16.msra.mxu0 %v1906
    %2739 = vmatprep.subr.bf16.mxu0 %v1909
    %2740 = vmatpush1.bf16.msra.mxu0 %v1908
    %2741 = vmatprep.subr.bf16.mxu0 %v1911
    %2742 = vmatpush1.bf16.msra.mxu0 %v1910
    %2743 = vmatprep.subr.bf16.mxu0 %v1913
    %2744 = vmatpush1.bf16.msra.mxu0 %v1912
    %2745 = vmatprep.subr.bf16.mxu0 %v1915
    %2746 = vmatpush1.bf16.msra.mxu0 %v1914
    %2747 = vmatprep.subr.bf16.mxu0 %v1917
    %2748 = vmatpush1.bf16.msra.mxu0 %v1916
    %2749 = vmatprep.subr.bf16.mxu0 %v1919
    %2750 = vmatpush1.bf16.msra.mxu0 %v1918
    %2751 = vmatprep.subr.bf16.mxu0 %v1921
    %2752 = vmatpush1.bf16.msra.mxu0 %v1920
    %2753 = vmatprep.subr.bf16.mxu0 %v1923
    %2754 = vmatpush1.bf16.msra.mxu0 %v1922
    %2755 = vmatprep.subr.bf16.mxu0 %v1925
    %2756 = vmatpush1.bf16.msra.mxu0 %v1924
    %2757 = vmatprep.subr.bf16.mxu0 %v1927
    %2758 = vmatpush1.bf16.msra.mxu0 %v1926
    %2759 = vmatprep.mubr.bf16.mxu0 %v487
    %2760 = vmatmul.mubr.bf16.gmra.mrb[0].mxu0 %v486
    %v2761 = vpop.f32.mrb[0].mxu0
    %v2762 = vadd.f32 %v2721, %v2761
    %v2763 = vpop.f32.mrb[0].mxu0
    %v2764 = vadd.f32 %v2723, %v2763
    %v2765 = vpop.f32.mrb[0].mxu0
    %v2766 = vpop.f32.mrb[0].mxu0
    %2767 = vdwg.mxu0
    %2768 = vmatprep.subr.bf16.mxu0 %v1929
    %2769 = vmatpush1.bf16.msra.mxu0 %v1928
    %2770 = vmatprep.subr.bf16.mxu0 %v1931
    %2771 = vmatpush1.bf16.msra.mxu0 %v1930
    %2772 = vmatprep.subr.bf16.mxu0 %v1933
    %2773 = vmatpush1.bf16.msra.mxu0 %v1932
    %2774 = vmatprep.subr.bf16.mxu0 %v1935
    %2775 = vmatpush1.bf16.msra.mxu0 %v1934
    %2776 = vmatprep.subr.bf16.mxu0 %v1937
    %2777 = vmatpush1.bf16.msra.mxu0 %v1936
    %2778 = vmatprep.subr.bf16.mxu0 %v1939
    %2779 = vmatpush1.bf16.msra.mxu0 %v1938
    %2780 = vmatprep.subr.bf16.mxu0 %v1941
    %2781 = vmatpush1.bf16.msra.mxu0 %v1940
    %2782 = vmatprep.subr.bf16.mxu0 %v1943
    %2783 = vmatpush1.bf16.msra.mxu0 %v1942
    %2784 = vmatprep.subr.bf16.mxu0 %v1945
    %2785 = vmatpush1.bf16.msra.mxu0 %v1944
    %2786 = vmatprep.subr.bf16.mxu0 %v1947
    %2787 = vmatpush1.bf16.msra.mxu0 %v1946
    %2788 = vmatprep.subr.bf16.mxu0 %v1949
    %2789 = vmatpush1.bf16.msra.mxu0 %v1948
    %2790 = vmatprep.subr.bf16.mxu0 %v1951
    %2791 = vmatpush1.bf16.msra.mxu0 %v1950
    %2792 = vmatprep.subr.bf16.mxu0 %v1953
    %2793 = vmatpush1.bf16.msra.mxu0 %v1952
    %2794 = vmatprep.subr.bf16.mxu0 %v1955
    %2795 = vmatpush1.bf16.msra.mxu0 %v1954
    %2796 = vmatprep.subr.bf16.mxu0 %v1957
    %2797 = vmatpush1.bf16.msra.mxu0 %v1956
    %2798 = vmatprep.subr.bf16.mxu0 %v1959
    %2799 = vmatpush1.bf16.msra.mxu0 %v1958
    %2800 = vmatprep.mubr.bf16.mxu0 %v489
    %2801 = vmatmul.mubr.bf16.gmra.mrb[0].mxu0 %v488
    %v2802 = vpop.f32.mrb[0].mxu0
    %v2803 = vadd.f32 %v2762, %v2802
    %v2804 = vpop.f32.mrb[0].mxu0
    %v2805 = vadd.f32 %v2764, %v2804
    %v2806 = vpop.f32.mrb[0].mxu0
    %v2807 = vpop.f32.mrb[0].mxu0
    %2808 = vdwg.mxu0
    %2809 = vmatprep.subr.bf16.mxu0 %v1961
    %2810 = vmatpush1.bf16.msra.mxu0 %v1960
    %2811 = vmatprep.subr.bf16.mxu0 %v1963
    %2812 = vmatpush1.bf16.msra.mxu0 %v1962
    %2813 = vmatprep.subr.bf16.mxu0 %v1965
    %2814 = vmatpush1.bf16.msra.mxu0 %v1964
    %2815 = vmatprep.subr.bf16.mxu0 %v1967
    %2816 = vmatpush1.bf16.msra.mxu0 %v1966
    %2817 = vmatprep.subr.bf16.mxu0 %v1969
    %2818 = vmatpush1.bf16.msra.mxu0 %v1968
    %2819 = vmatprep.subr.bf16.mxu0 %v1971
    %2820 = vmatpush1.bf16.msra.mxu0 %v1970
    %2821 = vmatprep.subr.bf16.mxu0 %v1973
    %2822 = vmatpush1.bf16.msra.mxu0 %v1972
    %2823 = vmatprep.subr.bf16.mxu0 %v1975
    %2824 = vmatpush1.bf16.msra.mxu0 %v1974
    %2825 = vmatprep.subr.bf16.mxu0 %v1977
    %2826 = vmatpush1.bf16.msra.mxu0 %v1976
    %2827 = vmatprep.subr.bf16.mxu0 %v1979
    %2828 = vmatpush1.bf16.msra.mxu0 %v1978
    %2829 = vmatprep.subr.bf16.mxu0 %v1981
    %2830 = vmatpush1.bf16.msra.mxu0 %v1980
    %2831 = vmatprep.subr.bf16.mxu0 %v1983
    %2832 = vmatpush1.bf16.msra.mxu0 %v1982
    %2833 = vmatprep.subr.bf16.mxu0 %v1985
    %2834 = vmatpush1.bf16.msra.mxu0 %v1984
    %2835 = vmatprep.subr.bf16.mxu0 %v1987
    %2836 = vmatpush1.bf16.msra.mxu0 %v1986
    %2837 = vmatprep.subr.bf16.mxu0 %v1989
    %2838 = vmatpush1.bf16.msra.mxu0 %v1988
    %2839 = vmatprep.subr.bf16.mxu0 %v1991
    %2840 = vmatpush1.bf16.msra.mxu0 %v1990
    %2841 = vmatprep.mubr.bf16.mxu0 %v491
    %2842 = vmatmul.mubr.bf16.gmra.mrb[0].mxu0 %v490
    %v2843 = vpop.f32.mrb[0].mxu0
    %v2844 = vadd.f32 %v2803, %v2843
    %v2845 = vpop.f32.mrb[0].mxu0
    %v2846 = vadd.f32 %v2805, %v2845
    %v2847 = vpop.f32.mrb[0].mxu0
    %v2848 = vpop.f32.mrb[0].mxu0
    %2849 = vdwg.mxu0
    %2850 = vmatprep.subr.bf16.mxu0 %v1993
    %2851 = vmatpush1.bf16.msra.mxu0 %v1992
    %2852 = vmatprep.subr.bf16.mxu0 %v1995
    %2853 = vmatpush1.bf16.msra.mxu0 %v1994
    %2854 = vmatprep.subr.bf16.mxu0 %v1997
    %2855 = vmatpush1.bf16.msra.mxu0 %v1996
    %2856 = vmatprep.subr.bf16.mxu0 %v1999
    %2857 = vmatpush1.bf16.msra.mxu0 %v1998
    %2858 = vmatprep.subr.bf16.mxu0 %v2001
    %2859 = vmatpush1.bf16.msra.mxu0 %v2000
    %2860 = vmatprep.subr.bf16.mxu0 %v2003
    %2861 = vmatpush1.bf16.msra.mxu0 %v2002
    %2862 = vmatprep.subr.bf16.mxu0 %v2005
    %2863 = vmatpush1.bf16.msra.mxu0 %v2004
    %2864 = vmatprep.subr.bf16.mxu0 %v2007
    %2865 = vmatpush1.bf16.msra.mxu0 %v2006
    %2866 = vmatprep.subr.bf16.mxu0 %v2009
    %2867 = vmatpush1.bf16.msra.mxu0 %v2008
    %2868 = vmatprep.subr.bf16.mxu0 %v2011
    %2869 = vmatpush1.bf16.msra.mxu0 %v2010
    %2870 = vmatprep.subr.bf16.mxu0 %v2013
    %2871 = vmatpush1.bf16.msra.mxu0 %v2012
    %2872 = vmatprep.subr.bf16.mxu0 %v2015
    %2873 = vmatpush1.bf16.msra.mxu0 %v2014
    %2874 = vmatprep.subr.bf16.mxu0 %v2017
    %2875 = vmatpush1.bf16.msra.mxu0 %v2016
    %2876 = vmatprep.subr.bf16.mxu0 %v2019
    %2877 = vmatpush1.bf16.msra.mxu0 %v2018
    %2878 = vmatprep.subr.bf16.mxu0 %v2021
    %2879 = vmatpush1.bf16.msra.mxu0 %v2020
    %2880 = vmatprep.subr.bf16.mxu0 %v2023
    %2881 = vmatpush1.bf16.msra.mxu0 %v2022
    %2882 = vmatprep.mubr.bf16.mxu0 %v493
    %2883 = vmatmul.mubr.bf16.gmra.mrb[0].mxu0 %v492
    %v2884 = vpop.f32.mrb[0].mxu0
    %v2885 = vadd.f32 %v2844, %v2884
    %v2886 = vpop.f32.mrb[0].mxu0
    %v2887 = vadd.f32 %v2846, %v2886
    %v2888 = vpop.f32.mrb[0].mxu0
    %v2889 = vpop.f32.mrb[0].mxu0
    %2890 = vdwg.mxu0
    %2891 = vmatprep.subr.bf16.mxu0 %v2025
    %2892 = vmatpush1.bf16.msra.mxu0 %v2024
    %2893 = vmatprep.subr.bf16.mxu0 %v2027
    %2894 = vmatpush1.bf16.msra.mxu0 %v2026
    %2895 = vmatprep.subr.bf16.mxu0 %v2029
    %2896 = vmatpush1.bf16.msra.mxu0 %v2028
    %2897 = vmatprep.subr.bf16.mxu0 %v2031
    %2898 = vmatpush1.bf16.msra.mxu0 %v2030
    %2899 = vmatprep.subr.bf16.mxu0 %v2033
    %2900 = vmatpush1.bf16.msra.mxu0 %v2032
    %2901 = vmatprep.subr.bf16.mxu0 %v2035
    %2902 = vmatpush1.bf16.msra.mxu0 %v2034
    %2903 = vmatprep.subr.bf16.mxu0 %v2037
    %2904 = vmatpush1.bf16.msra.mxu0 %v2036
    %2905 = vmatprep.subr.bf16.mxu0 %v2039
    %2906 = vmatpush1.bf16.msra.mxu0 %v2038
    %2907 = vmatprep.subr.bf16.mxu0 %v2041
    %2908 = vmatpush1.bf16.msra.mxu0 %v2040
    %2909 = vmatprep.subr.bf16.mxu0 %v2043
    %2910 = vmatpush1.bf16.msra.mxu0 %v2042
    %2911 = vmatprep.subr.bf16.mxu0 %v2045
    %2912 = vmatpush1.bf16.msra.mxu0 %v2044
    %2913 = vmatprep.subr.bf16.mxu0 %v2047
    %2914 = vmatpush1.bf16.msra.mxu0 %v2046
    %2915 = vmatprep.subr.bf16.mxu0 %v2049
    %2916 = vmatpush1.bf16.msra.mxu0 %v2048
    %2917 = vmatprep.subr.bf16.mxu0 %v2051
    %2918 = vmatpush1.bf16.msra.mxu0 %v2050
    %2919 = vmatprep.subr.bf16.mxu0 %v2053
    %2920 = vmatpush1.bf16.msra.mxu0 %v2052
    %2921 = vmatprep.subr.bf16.mxu0 %v2055
    %2922 = vmatpush1.bf16.msra.mxu0 %v2054
    %2923 = vmatprep.mubr.bf16.mxu0 %v495
    %2924 = vmatmul.mubr.bf16.gmra.mrb[0].mxu0 %v494
    %v2925 = vpop.f32.mrb[0].mxu0
    %v2926 = vadd.f32 %v2885, %v2925
    %v2927 = vpop.f32.mrb[0].mxu0
    %v2928 = vadd.f32 %v2887, %v2927
    %v2929 = vpop.f32.mrb[0].mxu0
    %v2930 = vpop.f32.mrb[0].mxu0
    %2931 = vdwg.mxu0
    %v2932 = vmax.f32 %v2926, 0.0
    %v2933 = vmax.f32 %v2928, 0.0
    %v2934 = vpack.c.bf16 %v2932, %v2932
    %v2935 = vpack.c.bf16 %v2933, %v2933
    %v2936 = vld [vmem:[%s3] sm:$0xff]
    %v2937 = vld [vmem:[%s3 + $0x8] sm:$0xff]
    %v2938 = vld [vmem:[%s3 + $0x10] sm:$0xff]
    %v2939 = vld [vmem:[%s3 + $0x18] sm:$0xff]
    %v2940 = vld [vmem:[%s3 + $0x20] sm:$0xff]
    %v2941 = vld [vmem:[%s3 + $0x28] sm:$0xff]
    %v2942 = vld [vmem:[%s3 + $0x30] sm:$0xff]
    %v2943 = vld [vmem:[%s3 + $0x38] sm:$0xff]
    %v2944 = vld [vmem:[%s3 + $0x40] sm:$0xff]
    %v2945 = vld [vmem:[%s3 + $0x48] sm:$0xff]
    %v2946 = vld [vmem:[%s3 + $0x50] sm:$0xff]
    %v2947 = vld [vmem:[%s3 + $0x58] sm:$0xff]
    %v2948 = vld [vmem:[%s3 + $0x60] sm:$0xff]
    %v2949 = vld [vmem:[%s3 + $0x68] sm:$0xff]
    %v2950 = vld [vmem:[%s3 + $0x70] sm:$0xff]
    %v2951 = vld [vmem:[%s3 + $0x78] sm:$0xff]
    %v2952 = vld [vmem:[%s3 + $0x80] sm:$0xff]
    %v2953 = vld [vmem:[%s3 + $0x88] sm:$0xff]
    %v2954 = vld [vmem:[%s3 + $0x90] sm:$0xff]
    %v2955 = vld [vmem:[%s3 + $0x98] sm:$0xff]
    %v2956 = vld [vmem:[%s3 + $0xa0] sm:$0xff]
    %v2957 = vld [vmem:[%s3 + $0xa8] sm:$0xff]
    %v2958 = vld [vmem:[%s3 + $0xb0] sm:$0xff]
    %v2959 = vld [vmem:[%s3 + $0xb8] sm:$0xff]
    %v2960 = vld [vmem:[%s3 + $0xc0] sm:$0xff]
    %v2961 = vld [vmem:[%s4] sm:$0x3]
    %v2963 = vlaneseq
    %v2964 = vshrl.u32 %v2963, 7
    %v2965 = vsub.s32 0, %v2964
    %v2966 = vrot.slane %v2961, %v2965
    %v2967 = vlaneseq
    %v2968 = vshrl.u32 %v2967, 7
    %v2969 = vsub.s32 1, %v2968
    %v2970 = vrot.slane %v2961, %v2969
    %v2998 = vunpack.c.l.b16 %v2936
    %v2999 = vunpack.c.h.b16 %v2936
    %v3000 = vunpack.c.l.b16 %v2937
    %v3001 = vunpack.c.h.b16 %v2937
    %v3002 = vunpack.c.l.b16 %v2938
    %v3003 = vunpack.c.h.b16 %v2938
    %v3004 = vunpack.c.l.b16 %v2939
    %v3005 = vunpack.c.h.b16 %v2939
    %v3006 = vunpack.c.l.b16 %v2940
    %v3007 = vunpack.c.h.b16 %v2940
    %v3008 = vunpack.c.l.b16 %v2941
    %v3009 = vunpack.c.h.b16 %v2941
    %v3010 = vunpack.c.l.b16 %v2942
    %v3011 = vunpack.c.h.b16 %v2942
    %v3012 = vunpack.c.l.b16 %v2943
    %v3013 = vunpack.c.h.b16 %v2943
    %v3014 = vunpack.c.l.b16 %v2944
    %v3015 = vunpack.c.h.b16 %v2944
    %v3016 = vunpack.c.l.b16 %v2945
    %v3017 = vunpack.c.h.b16 %v2945
    %v3018 = vunpack.c.l.b16 %v2946
    %v3019 = vunpack.c.h.b16 %v2946
    %v3020 = vunpack.c.l.b16 %v2947
    %v3021 = vunpack.c.h.b16 %v2947
    %v3022 = vunpack.c.l.b16 %v2948
    %v3023 = vunpack.c.h.b16 %v2948
    %v3024 = vunpack.c.l.b16 %v2949
    %v3025 = vunpack.c.h.b16 %v2949
    %v3026 = vunpack.c.l.b16 %v2950
    %v3027 = vunpack.c.h.b16 %v2950
    %v3028 = vunpack.c.l.b16 %v2951
    %v3029 = vunpack.c.h.b16 %v2951
    %v3030 = vunpack.c.l.b16 %v2952
    %v3031 = vunpack.c.h.b16 %v2952
    %v3032 = vunpack.c.l.b16 %v2953
    %v3033 = vunpack.c.h.b16 %v2953
    %v3034 = vunpack.c.l.b16 %v2954
    %v3035 = vunpack.c.h.b16 %v2954
    %v3036 = vunpack.c.l.b16 %v2955
    %v3037 = vunpack.c.h.b16 %v2955
    %v3038 = vunpack.c.l.b16 %v2956
    %v3039 = vunpack.c.h.b16 %v2956
    %v3040 = vunpack.c.l.b16 %v2957
    %v3041 = vunpack.c.h.b16 %v2957
    %v3042 = vunpack.c.l.b16 %v2958
    %v3043 = vunpack.c.h.b16 %v2958
    %v3044 = vunpack.c.l.b16 %v2959
    %v3045 = vunpack.c.h.b16 %v2959
    %v3046 = vunpack.c.l.b16 %v2960
    %v3047 = vunpack.c.h.b16 %v2960
    %v3048 = vpack.c.b16 %v3000, %v2998
    %v3049 = vpack.c.b16 %v3001, %v2999
    %v3050 = vpack.c.b16 %v3004, %v3002
    %v3051 = vpack.c.b16 %v3005, %v3003
    %v3052 = vpack.c.b16 %v3008, %v3006
    %v3053 = vpack.c.b16 %v3009, %v3007
    %v3054 = vpack.c.b16 %v3012, %v3010
    %v3055 = vpack.c.b16 %v3013, %v3011
    %v3056 = vpack.c.b16 %v3016, %v3014
    %v3057 = vpack.c.b16 %v3017, %v3015
    %v3058 = vpack.c.b16 %v3020, %v3018
    %v3059 = vpack.c.b16 %v3021, %v3019
    %v3060 = vpack.c.b16 %v3024, %v3022
    %v3061 = vpack.c.b16 %v3025, %v3023
    %v3062 = vpack.c.b16 %v3028, %v3026
    %v3063 = vpack.c.b16 %v3029, %v3027
    %v3064 = vpack.c.b16 %v3032, %v3030
    %v3065 = vpack.c.b16 %v3033, %v3031
    %v3066 = vpack.c.b16 %v3036, %v3034
    %v3067 = vpack.c.b16 %v3037, %v3035
    %v3068 = vpack.c.b16 %v3040, %v3038
    %v3069 = vpack.c.b16 %v3041, %v3039
    %v3070 = vpack.c.b16 %v3044, %v3042
    %v3071 = vpack.c.b16 %v3045, %v3043
    %v3072 = vpack.c.b16 %v3046, %v3046
    %v3073 = vpack.c.b16 %v3047, %v3047
    %vm3098 = vcmask 588800
    %v3100 = vsel %vm3098, %v2935, 0
    %vm3102 = vcmask 1043456
    %v3104 = vsel %vm3102, %v3072, 0
    %v3107 = vsel %vm3102, %v3073, 0
    %3109 = vmatprep.subr.bf16.mxu0 %v3049
    %3110 = vmatpush1.bf16.msra.mxu0 %v3048
    %3111 = vmatprep.subr.bf16.mxu0 %v3051
    %3112 = vmatpush1.bf16.msra.mxu0 %v3050
    %3113 = vmatprep.subr.bf16.mxu0 %v3053
    %3114 = vmatpush1.bf16.msra.mxu0 %v3052
    %3115 = vmatprep.subr.bf16.mxu0 %v3055
    %3116 = vmatpush1.bf16.msra.mxu0 %v3054
    %3117 = vmatprep.subr.bf16.mxu0 %v3057
    %3118 = vmatpush1.bf16.msra.mxu0 %v3056
    %3119 = vmatprep.subr.bf16.mxu0 %v3059
    %3120 = vmatpush1.bf16.msra.mxu0 %v3058
    %3121 = vmatprep.subr.bf16.mxu0 %v3061
    %3122 = vmatpush1.bf16.msra.mxu0 %v3060
    %3123 = vmatprep.subr.bf16.mxu0 %v3063
    %3124 = vmatpush1.bf16.msra.mxu0 %v3062
    %3125 = vmatprep.subr.bf16.mxu0 %v3065
    %3126 = vmatpush1.bf16.msra.mxu0 %v3064
    %3127 = vmatprep.subr.bf16.mxu0 %v3067
    %3128 = vmatpush1.bf16.msra.mxu0 %v3066
    %3129 = vmatprep.subr.bf16.mxu0 %v3069
    %3130 = vmatpush1.bf16.msra.mxu0 %v3068
    %3131 = vmatprep.subr.bf16.mxu0 %v3071
    %3132 = vmatpush1.bf16.msra.mxu0 %v3070
    %3133 = vmatprep.subr.bf16.mxu0 %v3107
    %3134 = vmatpush1.bf16.msra.mxu0 %v3104
    %3135 = vmatprep.subr.bf16.mxu0 0
    %3136 = vmatpush1.bf16.msra.mxu0 0
    %3137 = vmatprep.subr.bf16.mxu0 0
    %3138 = vmatpush1.bf16.msra.mxu0 0
    %3139 = vmatprep.subr.bf16.mxu0 0
    %3140 = vmatpush1.bf16.msra.mxu0 0
    %3141 = vmatprep.mubr.bf16.mxu0 %v3100
    %3142 = vmatmul.mubr.bf16.gmra.mrb[0].mxu0 %v2934
    %v3143 = vpop.f32.mrb[0].mxu0
    %v3144 = vadd.f32 %v2966, %v3143
    %v3145 = vpop.f32.mrb[0].mxu0
    %v3146 = vadd.f32 %v2970, %v3145
    %v3147 = vpop.f32.mrb[0].mxu0
    %v3148 = vpop.f32.mrb[0].mxu0
    %3149 = vdwg.mxu0
    %v3150 = vmax.f32 %v3144, 0.0
    %v3151 = vmax.f32 %v3146, 0.0
    %v3152 = vpack.c.bf16 %v3150, %v3150
    %v3153 = vpack.c.bf16 %v3151, %v3151
    %v3154 = vld [vmem:[%s5] sm:$0xf]
    %v3155 = vld [vmem:[%s5 + $0x4] sm:$0xf]
    %v3156 = vld [vmem:[%s5 + $0x8] sm:$0xf]
    %v3157 = vld [vmem:[%s5 + $0xc] sm:$0xf]
    %v3158 = vld [vmem:[%s5 + $0x10] sm:$0xf]
    %v3159 = vld [vmem:[%s5 + $0x14] sm:$0xf]
    %v3160 = vld [vmem:[%s5 + $0x18] sm:$0xf]
    %v3161 = vld [vmem:[%s5 + $0x1c] sm:$0xf]
    %v3162 = vld [vmem:[%s5 + $0x20] sm:$0xf]
    %v3163 = vld [vmem:[%s5 + $0x24] sm:$0xf]
    %v3164 = vld [vmem:[%s5 + $0x28] sm:$0xf]
    %v3165 = vld [vmem:[%s5 + $0x2c] sm:$0xf]
    %v3166 = vld [vmem:[%s5 + $0x30] sm:$0xf]
    %v3167 = vld [vmem:[%s5 + $0x34] sm:$0xf]
    %v3168 = vld [vmem:[%s5 + $0x38] sm:$0xf]
    %v3169 = vld [vmem:[%s5 + $0x3c] sm:$0xf]
    %v3170 = vld [vmem:[%s5 + $0x40] sm:$0xf]
    %v3171 = vld [vmem:[%s5 + $0x44] sm:$0xf]
    %v3172 = vld [vmem:[%s5 + $0x48] sm:$0x7]
    %v3173 = vld [vmem:[%s6] sm:$0x1]
    %v3175 = vlaneseq
    %v3176 = vshrl.u32 %v3175, 7
    %v3177 = vsub.s32 0, %v3176
    %v3178 = vrot.slane %v3173, %v3177
    %v3199 = vunpack.c.l.b16 %v3154
    %v3200 = vunpack.c.l.b16 %v3155
    %v3201 = vunpack.c.l.b16 %v3156
    %v3202 = vunpack.c.l.b16 %v3157
    %v3203 = vunpack.c.l.b16 %v3158
    %v3204 = vunpack.c.l.b16 %v3159
    %v3205 = vunpack.c.l.b16 %v3160
    %v3206 = vunpack.c.l.b16 %v3161
    %v3207 = vunpack.c.l.b16 %v3162
    %v3208 = vunpack.c.l.b16 %v3163
    %v3209 = vunpack.c.l.b16 %v3164
    %v3210 = vunpack.c.l.b16 %v3165
    %v3211 = vunpack.c.l.b16 %v3166
    %v3212 = vunpack.c.l.b16 %v3167
    %v3213 = vunpack.c.l.b16 %v3168
    %v3214 = vunpack.c.l.b16 %v3169
    %v3215 = vunpack.c.l.b16 %v3170
    %v3216 = vunpack.c.l.b16 %v3171
    %v3217 = vunpack.c.l.b16 %v3172
    %v3218 = vpack.c.b16 %v3200, %v3199
    %v3219 = vpack.c.b16 %v3202, %v3201
    %v3220 = vpack.c.b16 %v3204, %v3203
    %v3221 = vpack.c.b16 %v3206, %v3205
    %v3222 = vpack.c.b16 %v3208, %v3207
    %v3223 = vpack.c.b16 %v3210, %v3209
    %v3224 = vpack.c.b16 %v3212, %v3211
    %v3225 = vpack.c.b16 %v3214, %v3213
    %v3226 = vpack.c.b16 %v3216, %v3215
    %v3227 = vpack.c.b16 %v3217, %v3217
    %vm3237 = vcmask 179200
    %v3239 = vsel %vm3237, %v3153, 0
    %vm3241 = vcmask 1042432
    %v3243 = vsel %vm3241, %v3227, 0
    %3245 = vmatprep.subr.bf16.mxu0 0
    %3246 = vmatpush1.bf16.msra.mxu0 %v3218
    %3247 = vmatprep.subr.bf16.mxu0 0
    %3248 = vmatpush1.bf16.msra.mxu0 %v3219
    %3249 = vmatprep.subr.bf16.mxu0 0
    %3250 = vmatpush1.bf16.msra.mxu0 %v3220
    %3251 = vmatprep.subr.bf16.mxu0 0
    %3252 = vmatpush1.bf16.msra.mxu0 %v3221
    %3253 = vmatprep.subr.bf16.mxu0 0
    %3254 = vmatpush1.bf16.msra.mxu0 %v3222
    %3255 = vmatprep.subr.bf16.mxu0 0
    %3256 = vmatpush1.bf16.msra.mxu0 %v3223
    %3257 = vmatprep.subr.bf16.mxu0 0
    %3258 = vmatpush1.bf16.msra.mxu0 %v3224
    %3259 = vmatprep.subr.bf16.mxu0 0
    %3260 = vmatpush1.bf16.msra.mxu0 %v3225
    %3261 = vmatprep.subr.bf16.mxu0 0
    %3262 = vmatpush1.bf16.msra.mxu0 %v3226
    %3263 = vmatprep.subr.bf16.mxu0 0
    %3264 = vmatpush1.bf16.msra.mxu0 %v3243
    %3265 = vmatprep.subr.bf16.mxu0 0
    %3266 = vmatpush1.bf16.msra.mxu0 0
    %3267 = vmatprep.subr.bf16.mxu0 0
    %3268 = vmatpush1.bf16.msra.mxu0 0
    %3269 = vmatprep.subr.bf16.mxu0 0
    %3270 = vmatpush1.bf16.msra.mxu0 0
    %3271 = vmatprep.subr.bf16.mxu0 0
    %3272 = vmatpush1.bf16.msra.mxu0 0
    %3273 = vmatprep.subr.bf16.mxu0 0
    %3274 = vmatpush1.bf16.msra.mxu0 0
    %3275 = vmatprep.subr.bf16.mxu0 0
    %3276 = vmatpush1.bf16.msra.mxu0 0
    %3277 = vmatprep.mubr.bf16.mxu0 %v3239
    %3278 = vmatmul.mubr.bf16.gmra.mrb[0].mxu0 %v3152
    %v3279 = vpop.f32.mrb[0].mxu0
    %v3280 = vadd.f32 %v3178, %v3279
    %v3281 = vpop.f32.mrb[0].mxu0
    %v3282 = vpop.f32.mrb[0].mxu0
    %v3283 = vpop.f32.mrb[0].mxu0
    %3284 = vdwg.mxu0
    %vm3285 = vcmask 80896
    %v3286 = vsel %vm3285, %v3280, -inf
    %3287 = vmax.xlane.f32.xlu0 %v3286
    %v3288 = vpop.xlane.xlu0 %3287
    %v3289 = vsub.f32 %v3280, %v3288
    %v3290 = vmul.f32 %v3289, 1.442695
    %v3291 = vpow.pop %v3290
    %v3292 = vsel %vm3285, %v3291, 0.0
    %3293 = vadd.xlane.f32.xlu0 %v3292
    %v3294 = vpop.xlane.xlu0 %3293
    %v3295 = vrcp.pop %v3294
    %v3296 = vmul.f32 %v3291, %v3295
    %3297 = vst.msk [vmem:[#allocation2] sm:$0xff] %vm3285, %v3296
    // Predicated region
    $region30: #{tpu_custom_call.1} parent=1 // pred_check
      _
    $region31: #{tpu_custom_call.1} parent=1 // pred_check_branch
      %3299 = sbr.rel (0) target = $region33
    $region32: #{tpu_custom_call.1} parent=1 // pred_region
      %s3301 = ssub.s32 128, 128
      %3302 = vsyncadd [#allocation3], %s3301
      %s3304 = sshll.u32 [#allocation2], 4
      %s3305 = int_to_ptr.vmem [resolvable:$true] %s3304
      %3307 = dma.vmem_to_hbm [thread:$0]  %s3305, 128, %s7, [#allocation3]
    $region33: #{tpu_custom_call.1} parent=1 // pred_fallthru
      _
    // Predicated region
    $region34: #{tpu_custom_call.1} parent=1 // pred_check
      _
    $region35: #{tpu_custom_call.1} parent=1 // pred_check_branch
      %3309 = sbr.rel (0) target = $region37
    $region36: #{tpu_custom_call.1} parent=1 // pred_region
      %3310 = dma.done [#allocation3], 128
    $region37: #{tpu_custom_call.1} parent=1 // pred_fallthru
      _
    %3311 = vsyncpa [#allocation3], 1

</llo_original>
